<compile_context>
chip_gen: v7x
topology: tpu7x:2x2x1
jax: 0.10.0
libtpu: 0.0.40
codegen_flags: <defaults>
</compile_context>

<pallas_src>
import jax
import jax.numpy as jnp
import numpy as np
from jax.experimental import pallas as pl
from jax.experimental.pallas import tpu as pltpu

# ----------------------------------------------------------------------------
# Static shapes implied by Net's default hyper-parameters
# ----------------------------------------------------------------------------
H_IN, W_IN, C_IN = 32, 32, 3
C1, K1 = 6, 2                              # conv1: 3 -> 6, kernel 2, stride 1
C2, K2 = 6, 3                              # conv2: 6 -> 6, kernel 3, stride 1
H1, W1 = H_IN - K1 + 1, W_IN - K1 + 1      # 31, 31
HP1, WP1 = H1 - 1, W1 - 1                  # 30, 30  (maxpool k=2, stride=1)
H2, W2 = HP1 - K2 + 1, WP1 - K2 + 1        # 28, 28
HP2, WP2 = H2 - 1, W2 - 1                  # 27, 27
FLAT = C2 * HP2 * WP2                      # 4374
N_OUT = 10

# Stacked (channel-major, rows = channel*stride + row) layouts used on-chip.
R1 = C1 * H1                               # 186  conv1 output rows
RP1 = R1 - 1                               # 185  pool1 output rows (last is junk-per-channel, zero-weighted)
R2 = C2 * H2                               # 168  conv2 output rows
RP2 = R2 - 1                               # 167  pool2 output rows
KAUG = 2 * C_IN * H_IN                     # 192  conv1 K dim ([x ; x shifted])
NROW_E = N_OUT * WP2                       # 270  FC block-diag rows

_FLOPS = 2 * (R1 * KAUG * W_IN            # conv1 matmul
              + 3 * R2 * RP1 * WP1        # conv2 matmuls
              + NROW_E * RP2 * WP2        # FC main matmul
              + N_OUT * NROW_E * WP2)     # FC fold matmul
_BYTES = 4 * (KAUG * W_IN + R1 * KAUG + R1 + 3 * R2 * RP1 + R2
              + NROW_E * RP2 + NROW_E * WP2 + N_OUT * NROW_E + 2 * N_OUT)


# ----------------------------------------------------------------------------
# Fused kernel: whole forward pass for sample 0, all activations on-chip
# ----------------------------------------------------------------------------
def _fused_net_kernel(x_ref, m1_ref, b1_ref, m2_ref, b2_ref,
                      wfc_ref, mask_ref, sel_ref, bfc_ref, out_ref):
    f32 = jnp.float32

    # ---- conv1 + bias + ReLU: single MXU matmul (dj folded into K on host) ----
    a1 = jnp.dot(m1_ref[...], x_ref[...], preferred_element_type=f32)   # (186, 32)
    a1 = jnp.maximum(a1 + b1_ref[...], 0.0)          # col 31 is junk (finite), never read

    # ---- pool1 (2x2, stride 1): shifted maxes (VPU/XLU) ----
    v1 = jnp.maximum(a1[0:RP1, :], a1[1:R1, :])                          # (185, 32)
    h1 = jnp.maximum(v1[:, 0:WP1], v1[:, 1:WP1 + 1])                     # (185, 30)
    # rows r with r % 31 == 30 mix channels -> junk, zero-weighted inside m2.

    # ---- conv2 + bias + ReLU: three banded MXU matmuls (one per kernel col dj) ----
    a2 = jnp.dot(m2_ref[0], h1, preferred_element_type=f32)[:, 0:W2]     # (168, 28)
    a2 = a2 + jnp.dot(m2_ref[1], h1, preferred_element_type=f32)[:, 1:W2 + 1]
    a2 = a2 + jnp.dot(m2_ref[2], h1, preferred_element_type=f32)[:, 2:W2 + 2]
    a2 = jnp.maximum(a2 + b2_ref[...], 0.0)

    # ---- pool2 (2x2, stride 1) ----
    v2 = jnp.maximum(a2[0:RP2, :], a2[1:R2, :])                          # (167, 28)
    h2 = jnp.maximum(v2[:, 0:WP2], v2[:, 1:WP2 + 1])                     # (167, 27)
    # rows r with r % 28 == 27 are junk -> zero columns in wfc_ref.

    # ---- FC on the MXU via the block-diagonal trick (see prepare_params) ----
    e = jnp.dot(wfc_ref[...], h2, preferred_element_type=f32)            # (270, 27)
    g = e * mask_ref[...]                                                # keep E[k*27+j, j]
    fd = jnp.dot(sel_ref[...], g, preferred_element_type=f32)            # (10, 27)
    out_ref[...] = jnp.sum(fd, axis=1, keepdims=True) + bfc_ref[...]     # single (10,1) store


# ----------------------------------------------------------------------------
# Host-side parameter handling + forward wrapper
# ----------------------------------------------------------------------------
def init_params(key):
    """Random parameters with the same shapes/layouts as the PyTorch module."""
    k1, k2, k3, k4, k5, k6 = jax.random.split(key, 6)
    return {
        "w1": jax.random.normal(k1, (C1, C_IN, K1, K1), jnp.float32) * 0.1,   # OIHW
        "b1": jax.random.normal(k2, (C1,), jnp.float32) * 0.1,
        "w2": jax.random.normal(k3, (C2, C1, K2, K2), jnp.float32) * 0.1,     # OIHW
        "b2": jax.random.normal(k4, (C2,), jnp.float32) * 0.1,
        "wfc": jax.random.normal(k5, (N_OUT, FLAT), jnp.float32) * 0.02,      # (out, in)
        "bfc": jax.random.normal(k6, (N_OUT,), jnp.float32) * 0.02,
    }


def prepare_params(params):
    """One-time host-side re-layout: encode the convs and the FC as lane-dense
    2-D matrices so everything runs on the MXU (static, free)."""
    w1 = np.asarray(params["w1"], np.float32)
    b1 = np.asarray(params["b1"], np.float32)
    w2 = np.asarray(params["w2"], np.float32)
    b2 = np.asarray(params["b2"], np.float32)
    wfc = np.asarray(params["wfc"], np.float32)
    bfc = np.asarray(params["bfc"], np.float32)

    # conv1 as one banded matrix over stacked rows.  Columns 0..95 act on x,
    # columns 96..191 act on x shifted left by one column (dj = 1 taps).
    m1 = np.zeros((R1, KAUG), np.float32)
    for co in range(C1):
        for i in range(H1):
            r = co * H1 + i
            for ci in range(C_IN):
                for di in range(K1):
                    for dj in range(K1):
                        m1[r, dj * (C_IN * H_IN) + ci * H_IN + i + di] = w1[co, ci, di, dj]

    # conv2 as three banded matrices (one per kernel column dj) acting on the
    # stacked pool1 output (185 rows, per-channel row stride = 31).
    m2 = np.zeros((K2, R2, RP1), np.float32)
    for co in range(C2):
        for i2 in range(H2):
            r = co * H2 + i2
            for ci in range(C1):
                for di in range(K2):
                    for dj in range(K2):
                        m2[dj, r, ci * H1 + i2 + di] = w2[co, ci, di, dj]

    # FC block-diagonal encoding:
    #   wfc_mat[k*27 + j, c*28 + i] = wfc[k, c*729 + i*27 + j]   (torch CHW flatten)
    # Columns with i == 27 (the junk pool2 rows) stay zero.
    wfc4 = wfc.reshape(N_OUT, C2, HP2, WP2)
    w4 = np.zeros((N_OUT, WP2, C2, H2), np.float32)
    w4[:, :, :, :HP2] = np.transpose(wfc4, (0, 3, 1, 2))            # [k, j, c, i]
    wfc_mat = w4.reshape(NROW_E, C2 * H2)[:, :RP2]                  # (270, 167)

    mask = np.tile(np.eye(WP2, dtype=np.float32), (N_OUT, 1))       # (270, 27)
    sel = np.kron(np.eye(N_OUT, dtype=np.float32),
                  np.ones((1, WP2), np.float32))                    # (10, 270)

    return {
        "m1": jnp.asarray(m1),
        "b1r": jnp.asarray(np.repeat(b1, H1).reshape(R1, 1)),
        "m2": jnp.asarray(m2),
        "b2r": jnp.asarray(np.repeat(b2, H2).reshape(R2, 1)),
        "wfc_mat": jnp.asarray(wfc_mat),
        "mask": jnp.asarray(mask),
        "sel": jnp.asarray(sel),
        "bfc_c": jnp.asarray(bfc.reshape(N_OUT, 1)),
    }


@jax.jit
def net_forward(x_nchw, prepped):
    # The reference forward only works with batch == 2 (tensor unpack at the
    # second MaxPool); its output depends only on sample 0.
    assert x_nchw.shape == (2, C_IN, H_IN, W_IN)

    # Build the augmented conv1 RHS on the host side (tiny XLA ops, ~24 KB):
    # rows 0..95 = x (channel-major stacked), rows 96..191 = x shifted left by
    # one column (zero-padded) so conv1 is a single matmul.
    x0 = x_nchw[0]                                            # sample 1 is dead code
    x_main = x0.reshape(C_IN * H_IN, W_IN)
    x_shift = jnp.pad(x0[:, :, 1:], ((0, 0), (0, 0), (0, 1))).reshape(C_IN * H_IN, W_IN)
    x_aug = jnp.concatenate([x_main, x_shift], axis=0)        # (192, 32)

    def vspec(shape):
        zeros = (0,) * len(shape)
        return pl.BlockSpec(shape, lambda i, _z=zeros: _z)

    out = pl.pallas_call(
        _fused_net_kernel,
        out_shape=jax.ShapeDtypeStruct((N_OUT, 1), jnp.float32),
        grid=(1,),
        in_specs=[
            vspec((KAUG, W_IN)),        # x_aug              (192, 32)
            vspec((R1, KAUG)),          # conv1 banded mat   (186, 192)
            vspec((R1, 1)),             # conv1 bias rows    (186, 1)
            vspec((K2, R2, RP1)),       # conv2 banded mats  (3, 168, 185)
            vspec((R2, 1)),             # conv2 bias rows    (168, 1)
            vspec((NROW_E, RP2)),       # FC matrix          (270, 167)  lane-dense
            vspec((NROW_E, WP2)),       # FC block-diag mask (270, 27)
            vspec((N_OUT, NROW_E)),     # FC selector        (10, 270)
            vspec((N_OUT, 1)),          # FC bias            (10, 1)
        ],
        out_specs=pl.BlockSpec((N_OUT, 1), lambda i: (0, 0)),
        compiler_params=pltpu.CompilerParams(dimension_semantics=("arbitrary",)),
        cost_estimate=pl.CostEstimate(flops=_FLOPS, transcendentals=0,
                                      bytes_accessed=_BYTES),
    )(x_aug, prepped["m1"], prepped["b1r"], prepped["m2"], prepped["b2r"],
      prepped["wfc_mat"], prepped["mask"], prepped["sel"], prepped["bfc_c"])
    return out.reshape(1, N_OUT)          # (10,1) -> (1,10), same element order


# ----------------------------------------------------------------------------
# Pure-JAX/XLA reference (reproduces the PyTorch forward) for correctness check
# ----------------------------------------------------------------------------
def _ref_forward(x_nchw, params):
    hi = jax.lax.Precision.HIGHEST
    y = jax.lax.conv_general_dilated(
        x_nchw, params["w1"], window_strides=(1, 1), padding="VALID",
        dimension_numbers=("NCHW", "OIHW", "NCHW"), precision=hi)
    y = jnp.maximum(y + params["b1"][None, :, None, None], 0.0)
    y = jax.lax.reduce_window(y, -jnp.inf, jax.lax.max,
                              (1, 1, 2, 2), (1, 1, 1, 1), "VALID")
    y = jax.lax.conv_general_dilated(
        y, params["w2"], window_strides=(1, 1), padding="VALID",
        dimension_numbers=("NCHW", "OIHW", "NCHW"), precision=hi)
    y = jnp.maximum(y + params["b2"][None, :, None, None], 0.0)
    y = jax.lax.reduce_window(y, -jnp.inf, jax.lax.max,
                              (1, 1, 2, 2), (1, 1, 1, 1), "VALID")
    # literal `x, index = l(x)` on a plain tensor: keep sample 0, CHW flatten.
    x0 = y[0].reshape(1, FLAT)
    return jnp.dot(x0, params["wfc"].T, precision=hi) + params["bfc"][None, :]


if __name__ == "__main__":
    key = jax.random.PRNGKey(0)
    kx, kp = jax.random.split(key)
    x = jax.random.normal(kx, (2, C_IN, H_IN, W_IN), jnp.float32)   # NCHW, batch 2
    params = init_params(kp)
    prepped = prepare_params(params)

    out = jax.block_until_ready(net_forward(x, prepped))
    assert out.shape == (1, N_OUT) and out.dtype == jnp.float32

    ref = jax.block_until_ready(_ref_forward(x, params))
    # Tolerance leaves headroom for the MXU's f32 matmul emulation path.
    err = float(jnp.max(jnp.abs(out - ref)))
    assert bool(jnp.allclose(out, ref, rtol=2e-3, atol=2e-3)), (
        "max abs err = %r" % err)

    print("KERNEL_OK")
</pallas_src>

<mosaic_0001>
module attributes {stable_mosaic.version = 11 : i64} {
  func.func @_fused_net_kernel(%arg0: i32, %arg1: memref<192x32xf32, #tpu.memory_space<vmem>>, %arg2: memref<186x192xf32, #tpu.memory_space<vmem>>, %arg3: memref<186x1xf32, #tpu.memory_space<vmem>>, %arg4: memref<3x168x185xf32, #tpu.memory_space<vmem>>, %arg5: memref<168x1xf32, #tpu.memory_space<vmem>>, %arg6: memref<270x167xf32, #tpu.memory_space<vmem>>, %arg7: memref<270x27xf32, #tpu.memory_space<vmem>>, %arg8: memref<10x270xf32, #tpu.memory_space<vmem>>, %arg9: memref<10x1xf32, #tpu.memory_space<vmem>>, %arg10: memref<10x1xf32, #tpu.memory_space<vmem>>) attributes {dimension_semantics = [#tpu.dimension_semantics<arbitrary>], iteration_bounds = array<i64: 1>, scalar_prefetch = 0 : i64, scratch_operands = 0 : i64, tpu.core_type = #tpu.core_type<tc>, window_params = [{pipeline_mode = #tpu.pipeline_mode<synchronous>, transform_indices = @transform_0, window_bounds = array<i64: 192, 32>}, {pipeline_mode = #tpu.pipeline_mode<synchronous>, transform_indices = @transform_1, window_bounds = array<i64: 186, 192>}, {pipeline_mode = #tpu.pipeline_mode<synchronous>, transform_indices = @transform_2, window_bounds = array<i64: 186, 1>}, {pipeline_mode = #tpu.pipeline_mode<synchronous>, transform_indices = @transform_3, window_bounds = array<i64: 3, 168, 185>}, {pipeline_mode = #tpu.pipeline_mode<synchronous>, transform_indices = @transform_4, window_bounds = array<i64: 168, 1>}, {pipeline_mode = #tpu.pipeline_mode<synchronous>, transform_indices = @transform_5, window_bounds = array<i64: 270, 167>}, {pipeline_mode = #tpu.pipeline_mode<synchronous>, transform_indices = @transform_6, window_bounds = array<i64: 270, 27>}, {pipeline_mode = #tpu.pipeline_mode<synchronous>, transform_indices = @transform_7, window_bounds = array<i64: 10, 270>}, {pipeline_mode = #tpu.pipeline_mode<synchronous>, transform_indices = @transform_8, window_bounds = array<i64: 10, 1>}, {pipeline_mode = #tpu.pipeline_mode<synchronous>, transform_indices = @transform_9, window_bounds = array<i64: 10, 1>}]} {
    %c0 = arith.constant 0 : index
    %c0_0 = arith.constant 0 : index
    %0 = vector.load %arg2[%c0, %c0_0] : memref<186x192xf32, #tpu.memory_space<vmem>>, vector<186x192xf32>
    %c0_1 = arith.constant 0 : index
    %c0_2 = arith.constant 0 : index
    %1 = vector.load %arg1[%c0_1, %c0_2] : memref<192x32xf32, #tpu.memory_space<vmem>>, vector<192x32xf32>
    %cst = arith.constant dense<0.000000e+00> : vector<186x32xf32>
    %2 = tpu.matmul %0, %1, %cst {dimension_numbers = #tpu.dot_dimension_numbers<[1], [0], [0], [1], [0, 0, 1, 1], [], []>} : vector<186x192xf32>, vector<192x32xf32>, vector<186x32xf32> -> vector<186x32xf32>
    %c0_3 = arith.constant 0 : index
    %c0_4 = arith.constant 0 : index
    %3 = vector.load %arg3[%c0_3, %c0_4] : memref<186x1xf32, #tpu.memory_space<vmem>>, vector<186x1xf32>
    %4 = vector.broadcast %3 : vector<186x1xf32> to vector<186x32xf32>
    %5 = arith.addf %2, %4 : vector<186x32xf32>
    %cst_5 = arith.constant 0.000000e+00 : f32
    %6 = vector.broadcast %cst_5 : f32 to vector<186x32xf32>
    %7 = arith.maximumf %5, %6 : vector<186x32xf32>
    %8 = vector.extract_strided_slice %7 {offsets = [0, 0], sizes = [185, 32], strides = [1, 1]} : vector<186x32xf32> to vector<185x32xf32>
    %9 = vector.extract_strided_slice %7 {offsets = [1, 0], sizes = [185, 32], strides = [1, 1]} : vector<186x32xf32> to vector<185x32xf32>
    %10 = arith.maximumf %8, %9 : vector<185x32xf32>
    %11 = vector.extract_strided_slice %10 {offsets = [0, 0], sizes = [185, 30], strides = [1, 1]} : vector<185x32xf32> to vector<185x30xf32>
    %12 = vector.extract_strided_slice %10 {offsets = [0, 1], sizes = [185, 30], strides = [1, 1]} : vector<185x32xf32> to vector<185x30xf32>
    %13 = arith.maximumf %11, %12 : vector<185x30xf32>
    %c0_6 = arith.constant 0 : index
    %c0_7 = arith.constant 0 : index
    %c0_8 = arith.constant 0 : index
    %14 = vector.load %arg4[%c0_6, %c0_7, %c0_8] : memref<3x168x185xf32, #tpu.memory_space<vmem>>, vector<1x168x185xf32>
    %15 = vector.shape_cast %14 : vector<1x168x185xf32> to vector<168x185xf32>
    %cst_9 = arith.constant dense<0.000000e+00> : vector<168x30xf32>
    %16 = tpu.matmul %15, %13, %cst_9 {dimension_numbers = #tpu.dot_dimension_numbers<[1], [0], [0], [1], [0, 0, 1, 1], [], []>} : vector<168x185xf32>, vector<185x30xf32>, vector<168x30xf32> -> vector<168x30xf32>
    %17 = vector.extract_strided_slice %16 {offsets = [0, 0], sizes = [168, 28], strides = [1, 1]} : vector<168x30xf32> to vector<168x28xf32>
    %c1 = arith.constant 1 : index
    %c0_10 = arith.constant 0 : index
    %c0_11 = arith.constant 0 : index
    %18 = vector.load %arg4[%c1, %c0_10, %c0_11] : memref<3x168x185xf32, #tpu.memory_space<vmem>>, vector<1x168x185xf32>
    %19 = vector.shape_cast %18 : vector<1x168x185xf32> to vector<168x185xf32>
    %cst_12 = arith.constant dense<0.000000e+00> : vector<168x30xf32>
    %20 = tpu.matmul %19, %13, %cst_12 {dimension_numbers = #tpu.dot_dimension_numbers<[1], [0], [0], [1], [0, 0, 1, 1], [], []>} : vector<168x185xf32>, vector<185x30xf32>, vector<168x30xf32> -> vector<168x30xf32>
    %21 = vector.extract_strided_slice %20 {offsets = [0, 1], sizes = [168, 28], strides = [1, 1]} : vector<168x30xf32> to vector<168x28xf32>
    %22 = arith.addf %17, %21 : vector<168x28xf32>
    %c2 = arith.constant 2 : index
    %c0_13 = arith.constant 0 : index
    %c0_14 = arith.constant 0 : index
    %23 = vector.load %arg4[%c2, %c0_13, %c0_14] : memref<3x168x185xf32, #tpu.memory_space<vmem>>, vector<1x168x185xf32>
    %24 = vector.shape_cast %23 : vector<1x168x185xf32> to vector<168x185xf32>
    %cst_15 = arith.constant dense<0.000000e+00> : vector<168x30xf32>
    %25 = tpu.matmul %24, %13, %cst_15 {dimension_numbers = #tpu.dot_dimension_numbers<[1], [0], [0], [1], [0, 0, 1, 1], [], []>} : vector<168x185xf32>, vector<185x30xf32>, vector<168x30xf32> -> vector<168x30xf32>
    %26 = vector.extract_strided_slice %25 {offsets = [0, 2], sizes = [168, 28], strides = [1, 1]} : vector<168x30xf32> to vector<168x28xf32>
    %27 = arith.addf %22, %26 : vector<168x28xf32>
    %c0_16 = arith.constant 0 : index
    %c0_17 = arith.constant 0 : index
    %28 = vector.load %arg5[%c0_16, %c0_17] : memref<168x1xf32, #tpu.memory_space<vmem>>, vector<168x1xf32>
    %29 = vector.broadcast %28 : vector<168x1xf32> to vector<168x28xf32>
    %30 = arith.addf %27, %29 : vector<168x28xf32>
    %cst_18 = arith.constant 0.000000e+00 : f32
    %31 = vector.broadcast %cst_18 : f32 to vector<168x28xf32>
    %32 = arith.maximumf %30, %31 : vector<168x28xf32>
    %33 = vector.extract_strided_slice %32 {offsets = [0, 0], sizes = [167, 28], strides = [1, 1]} : vector<168x28xf32> to vector<167x28xf32>
    %34 = vector.extract_strided_slice %32 {offsets = [1, 0], sizes = [167, 28], strides = [1, 1]} : vector<168x28xf32> to vector<167x28xf32>
    %35 = arith.maximumf %33, %34 : vector<167x28xf32>
    %36 = vector.extract_strided_slice %35 {offsets = [0, 0], sizes = [167, 27], strides = [1, 1]} : vector<167x28xf32> to vector<167x27xf32>
    %37 = vector.extract_strided_slice %35 {offsets = [0, 1], sizes = [167, 27], strides = [1, 1]} : vector<167x28xf32> to vector<167x27xf32>
    %38 = arith.maximumf %36, %37 : vector<167x27xf32>
    %c0_19 = arith.constant 0 : index
    %c0_20 = arith.constant 0 : index
    %39 = vector.load %arg6[%c0_19, %c0_20] : memref<270x167xf32, #tpu.memory_space<vmem>>, vector<270x167xf32>
    %cst_21 = arith.constant dense<0.000000e+00> : vector<270x27xf32>
    %40 = tpu.matmul %39, %38, %cst_21 {dimension_numbers = #tpu.dot_dimension_numbers<[1], [0], [0], [1], [0, 0, 1, 1], [], []>} : vector<270x167xf32>, vector<167x27xf32>, vector<270x27xf32> -> vector<270x27xf32>
    %c0_22 = arith.constant 0 : index
    %c0_23 = arith.constant 0 : index
    %41 = vector.load %arg7[%c0_22, %c0_23] : memref<270x27xf32, #tpu.memory_space<vmem>>, vector<270x27xf32>
    %42 = arith.mulf %40, %41 : vector<270x27xf32>
    %c0_24 = arith.constant 0 : index
    %c0_25 = arith.constant 0 : index
    %43 = vector.load %arg8[%c0_24, %c0_25] : memref<10x270xf32, #tpu.memory_space<vmem>>, vector<10x270xf32>
    %cst_26 = arith.constant dense<0.000000e+00> : vector<10x27xf32>
    %44 = tpu.matmul %43, %42, %cst_26 {dimension_numbers = #tpu.dot_dimension_numbers<[1], [0], [0], [1], [0, 0, 1, 1], [], []>} : vector<10x270xf32>, vector<270x27xf32>, vector<10x27xf32> -> vector<10x27xf32>
    %cst_27 = arith.constant dense<0.000000e+00> : vector<10xf32>
    %45 = vector.multi_reduction <add>, %44, %cst_27 [1] : vector<10x27xf32> to vector<10xf32>
    %46 = vector.shape_cast %45 : vector<10xf32> to vector<10x1xf32>
    %c0_28 = arith.constant 0 : index
    %c0_29 = arith.constant 0 : index
    %47 = vector.load %arg9[%c0_28, %c0_29] : memref<10x1xf32, #tpu.memory_space<vmem>>, vector<10x1xf32>
    %48 = arith.addf %46, %47 : vector<10x1xf32>
    %c0_30 = arith.constant 0 : index
    %c0_31 = arith.constant 0 : index
    %49 = vector.load %arg10[%c0_30, %c0_31] : memref<10x1xf32, #tpu.memory_space<vmem>>, vector<10x1xf32>
    tpu.vector_store %arg10[%c0_30, %c0_31], %48 {strides = array<i32>} : memref<10x1xf32, #tpu.memory_space<vmem>>, vector<10x1xf32>,
    return
  }
  func.func @transform_0(%arg0: i32) -> (i32, i32) {
    %c0_i32 = arith.constant 0 : i32
    %c0_i32_0 = arith.constant 0 : i32
    %c0_i32_1 = arith.constant 0 : i32
    return %c0_i32, %c0_i32_0 : i32, i32
  }
  func.func @transform_1(%arg0: i32) -> (i32, i32) {
    %c0_i32 = arith.constant 0 : i32
    %c0_i32_0 = arith.constant 0 : i32
    %c0_i32_1 = arith.constant 0 : i32
    return %c0_i32, %c0_i32_0 : i32, i32
  }
  func.func @transform_2(%arg0: i32) -> (i32, i32) {
    %c0_i32 = arith.constant 0 : i32
    %c0_i32_0 = arith.constant 0 : i32
    %c0_i32_1 = arith.constant 0 : i32
    return %c0_i32, %c0_i32_0 : i32, i32
  }
  func.func @transform_3(%arg0: i32) -> (i32, i32, i32) {
    %c0_i32 = arith.constant 0 : i32
    %c0_i32_0 = arith.constant 0 : i32
    %c0_i32_1 = arith.constant 0 : i32
    %c0_i32_2 = arith.constant 0 : i32
    return %c0_i32, %c0_i32_0, %c0_i32_1 : i32, i32, i32
  }
  func.func @transform_4(%arg0: i32) -> (i32, i32) {
    %c0_i32 = arith.constant 0 : i32
    %c0_i32_0 = arith.constant 0 : i32
    %c0_i32_1 = arith.constant 0 : i32
    return %c0_i32, %c0_i32_0 : i32, i32
  }
  func.func @transform_5(%arg0: i32) -> (i32, i32) {
    %c0_i32 = arith.constant 0 : i32
    %c0_i32_0 = arith.constant 0 : i32
    %c0_i32_1 = arith.constant 0 : i32
    return %c0_i32, %c0_i32_0 : i32, i32
  }
  func.func @transform_6(%arg0: i32) -> (i32, i32) {
    %c0_i32 = arith.constant 0 : i32
    %c0_i32_0 = arith.constant 0 : i32
    %c0_i32_1 = arith.constant 0 : i32
    return %c0_i32, %c0_i32_0 : i32, i32
  }
  func.func @transform_7(%arg0: i32) -> (i32, i32) {
    %c0_i32 = arith.constant 0 : i32
    %c0_i32_0 = arith.constant 0 : i32
    %c0_i32_1 = arith.constant 0 : i32
    return %c0_i32, %c0_i32_0 : i32, i32
  }
  func.func @transform_8(%arg0: i32) -> (i32, i32) {
    %c0_i32 = arith.constant 0 : i32
    %c0_i32_0 = arith.constant 0 : i32
    %c0_i32_1 = arith.constant 0 : i32
    return %c0_i32, %c0_i32_0 : i32, i32
  }
  func.func @transform_9(%arg0: i32) -> (i32, i32) {
    %c0_i32 = arith.constant 0 : i32
    %c0_i32_0 = arith.constant 0 : i32
    %c0_i32_1 = arith.constant 0 : i32
    return %c0_i32, %c0_i32_0 : i32, i32
  }
}

</mosaic_0001>

<llo_original>
// kernel: net_forward.1
$region0: #{net_forward.1}
  #allocation0 [shape = 'u32[]', space=smem, size = 0x4, offset = 0x4, fixed_abs, tag = 'smem constant byte address 0x4 - core index']
  #allocation1 [shape = 'u32[144,128]{1,0:T(1,128)}', space=vmem, size = 0x12000, scoped, tag = 'internal scratch']
  %s0 = inlined_call_operand.vmem [shape: f32[192,32], index: 0, kind: input, shape index: {}]
  %s1 = inlined_call_operand.vmem [shape: f32[186,192], index: 1, kind: input, shape index: {}]
  %s2 = inlined_call_operand.vmem [shape: f32[186,1], index: 2, kind: input, shape index: {}]
  %s3 = inlined_call_operand.vmem [shape: f32[3,168,185], index: 3, kind: input, shape index: {}]
  %s4 = inlined_call_operand.vmem [shape: f32[168,1], index: 4, kind: input, shape index: {}]
  %s5 = inlined_call_operand.vmem [shape: f32[270,167], index: 5, kind: input, shape index: {}]
  %s6 = inlined_call_operand.vmem [shape: f32[270,27], index: 6, kind: input, shape index: {}]
  %s7 = inlined_call_operand.vmem [shape: f32[10,270], index: 7, kind: input, shape index: {}]
  %s8 = inlined_call_operand.vmem [shape: f32[10,1], index: 8, kind: input, shape index: {}]
  %s9 = inlined_call_operand.vmem [shape: f32[10,1], index: 9, kind: output, shape index: {}]
  %s10 = sld [smem:[#allocation0]]
  $region46: #{net_forward.1} parent=0
    _
  %s12 = ssub.s32 1, %s10
  %s13 = scalar_select 0, %s12, %s10
  // Predicated region
  $region2: #{net_forward.1} parent=0 // pred_check
    _
  $region3: #{net_forward.1} parent=0 // pred_check_branch
    %15 = sbr.rel (0) target = $region5
  $region4: #{net_forward.1} parent=0 // pred_region
    _
  $region5: #{net_forward.1} parent=0 // pred_fallthru
    _
  // Predicated region
  $region6: #{net_forward.1} parent=0 // pred_check
    _
  $region7: #{net_forward.1} parent=0 // pred_check_branch
    %17 = sbr.rel (0) target = $region9
  $region8: #{net_forward.1} parent=0 // pred_region
    _
  $region9: #{net_forward.1} parent=0 // pred_fallthru
    _
  // Predicated region
  $region10: #{net_forward.1} parent=0 // pred_check
    _
  $region11: #{net_forward.1} parent=0 // pred_check_branch
    %19 = sbr.rel (0) target = $region13
  $region12: #{net_forward.1} parent=0 // pred_region
    _
  $region13: #{net_forward.1} parent=0 // pred_fallthru
    _
  // Predicated region
  $region14: #{net_forward.1} parent=0 // pred_check
    _
  $region15: #{net_forward.1} parent=0 // pred_check_branch
    %21 = sbr.rel (0) target = $region17
  $region16: #{net_forward.1} parent=0 // pred_region
    _
  $region17: #{net_forward.1} parent=0 // pred_fallthru
    _
  // Predicated region
  $region18: #{net_forward.1} parent=0 // pred_check
    _
  $region19: #{net_forward.1} parent=0 // pred_check_branch
    %23 = sbr.rel (0) target = $region21
  $region20: #{net_forward.1} parent=0 // pred_region
    _
  $region21: #{net_forward.1} parent=0 // pred_fallthru
    _
  // Predicated region
  $region22: #{net_forward.1} parent=0 // pred_check
    _
  $region23: #{net_forward.1} parent=0 // pred_check_branch
    %25 = sbr.rel (0) target = $region25
  $region24: #{net_forward.1} parent=0 // pred_region
    _
  $region25: #{net_forward.1} parent=0 // pred_fallthru
    _
  // Predicated region
  $region26: #{net_forward.1} parent=0 // pred_check
    _
  $region27: #{net_forward.1} parent=0 // pred_check_branch
    %27 = sbr.rel (0) target = $region29
  $region28: #{net_forward.1} parent=0 // pred_region
    _
  $region29: #{net_forward.1} parent=0 // pred_fallthru
    _
  // Predicated region
  $region30: #{net_forward.1} parent=0 // pred_check
    _
  $region31: #{net_forward.1} parent=0 // pred_check_branch
    %29 = sbr.rel (0) target = $region33
  $region32: #{net_forward.1} parent=0 // pred_region
    _
  $region33: #{net_forward.1} parent=0 // pred_fallthru
    _
  // Predicated region
  $region34: #{net_forward.1} parent=0 // pred_check
    _
  $region35: #{net_forward.1} parent=0 // pred_check_branch
    %31 = sbr.rel (0) target = $region37
  $region36: #{net_forward.1} parent=0 // pred_region
    _
  $region37: #{net_forward.1} parent=0 // pred_fallthru
    _
  %v32 = vld [vmem:[%s1] sm:$0xff]
  %v33 = vld [vmem:[%s1 + $0x8] sm:$0xff]
  %v34 = vld [vmem:[%s1 + $0x10] sm:$0xff]
  %v35 = vld [vmem:[%s1 + $0x18] sm:$0xff]
  %v36 = vld [vmem:[%s1 + $0x20] sm:$0xff]
  %v37 = vld [vmem:[%s1 + $0x28] sm:$0xff]
  %v38 = vld [vmem:[%s1 + $0x30] sm:$0xff]
  %v39 = vld [vmem:[%s1 + $0x38] sm:$0xff]
  %v40 = vld [vmem:[%s1 + $0x40] sm:$0xff]
  %v41 = vld [vmem:[%s1 + $0x48] sm:$0xff]
  %v42 = vld [vmem:[%s1 + $0x50] sm:$0xff]
  %v43 = vld [vmem:[%s1 + $0x58] sm:$0xff]
  %v44 = vld [vmem:[%s1 + $0x60] sm:$0xff]
  %v45 = vld [vmem:[%s1 + $0x68] sm:$0xff]
  %v46 = vld [vmem:[%s1 + $0x70] sm:$0xff]
  %v47 = vld [vmem:[%s1 + $0x78] sm:$0xff]
  %v48 = vld [vmem:[%s1 + $0x80] sm:$0xff]
  %v49 = vld [vmem:[%s1 + $0x88] sm:$0xff]
  %v50 = vld [vmem:[%s1 + $0x90] sm:$0xff]
  %v51 = vld [vmem:[%s1 + $0x98] sm:$0xff]
  %v52 = vld [vmem:[%s1 + $0xa0] sm:$0xff]
  %v53 = vld [vmem:[%s1 + $0xa8] sm:$0xff]
  %v54 = vld [vmem:[%s1 + $0xb0] sm:$0xff]
  %v55 = vld [vmem:[%s1 + $0xb8] sm:$0xff]
  %v56 = vld [vmem:[%s1 + $0xc0] sm:$0xff]
  %v57 = vld [vmem:[%s1 + $0xc8] sm:$0xff]
  %v58 = vld [vmem:[%s1 + $0xd0] sm:$0xff]
  %v59 = vld [vmem:[%s1 + $0xd8] sm:$0xff]
  %v60 = vld [vmem:[%s1 + $0xe0] sm:$0xff]
  %v61 = vld [vmem:[%s1 + $0xe8] sm:$0xff]
  %v62 = vld [vmem:[%s1 + $0xf0] sm:$0xff]
  %v63 = vld [vmem:[%s1 + $0xf8] sm:$0xff]
  %v64 = vld [vmem:[%s1 + $0x100] sm:$0xff]
  %v65 = vld [vmem:[%s1 + $0x108] sm:$0xff]
  %v66 = vld [vmem:[%s1 + $0x110] sm:$0xff]
  %v67 = vld [vmem:[%s1 + $0x118] sm:$0xff]
  %v68 = vld [vmem:[%s1 + $0x120] sm:$0xff]
  %v69 = vld [vmem:[%s1 + $0x128] sm:$0xff]
  %v70 = vld [vmem:[%s1 + $0x130] sm:$0xff]
  %v71 = vld [vmem:[%s1 + $0x138] sm:$0xff]
  %v72 = vld [vmem:[%s1 + $0x140] sm:$0xff]
  %v73 = vld [vmem:[%s1 + $0x148] sm:$0xff]
  %v74 = vld [vmem:[%s1 + $0x150] sm:$0xff]
  %v75 = vld [vmem:[%s1 + $0x158] sm:$0xff]
  %v76 = vld [vmem:[%s1 + $0x160] sm:$0xff]
  %v77 = vld [vmem:[%s1 + $0x168] sm:$0xff]
  %v78 = vld [vmem:[%s1 + $0x170] sm:$0x3]
  %v79 = vld [vmem:[%s1 + $0x178] sm:$0x3]
  %v80 = vld [vmem:[%s0] sm:$0xff]
  %v81 = vld [vmem:[%s0 + $0x8] sm:$0xff]
  %v82 = vld [vmem:[%s0 + $0x10] sm:$0xff]
  %v83 = vld [vmem:[%s0 + $0x18] sm:$0xff]
  %v84 = vld [vmem:[%s0 + $0x20] sm:$0xff]
  %v85 = vld [vmem:[%s0 + $0x28] sm:$0xff]
  %v86 = vld [vmem:[%s0 + $0x30] sm:$0xff]
  %v87 = vld [vmem:[%s0 + $0x38] sm:$0xff]
  %v88 = vld [vmem:[%s0 + $0x40] sm:$0xff]
  %v89 = vld [vmem:[%s0 + $0x48] sm:$0xff]
  %v90 = vld [vmem:[%s0 + $0x50] sm:$0xff]
  %v91 = vld [vmem:[%s0 + $0x58] sm:$0xff]
  %v92 = vld [vmem:[%s0 + $0x60] sm:$0xff]
  %v93 = vld [vmem:[%s0 + $0x68] sm:$0xff]
  %v94 = vld [vmem:[%s0 + $0x70] sm:$0xff]
  %v95 = vld [vmem:[%s0 + $0x78] sm:$0xff]
  %v96 = vld [vmem:[%s0 + $0x80] sm:$0xff]
  %v97 = vld [vmem:[%s0 + $0x88] sm:$0xff]
  %v98 = vld [vmem:[%s0 + $0x90] sm:$0xff]
  %v99 = vld [vmem:[%s0 + $0x98] sm:$0xff]
  %v100 = vld [vmem:[%s0 + $0xa0] sm:$0xff]
  %v101 = vld [vmem:[%s0 + $0xa8] sm:$0xff]
  %v102 = vld [vmem:[%s0 + $0xb0] sm:$0xff]
  %v103 = vld [vmem:[%s0 + $0xb8] sm:$0xff]
  %v104 = vld [vmem:[%s2] sm:$0xff]
  %v105 = vld [vmem:[%s2 + $0x8] sm:$0xff]
  %v106 = vld [vmem:[%s2 + $0x10] sm:$0xff]
  %v107 = vld [vmem:[%s2 + $0x18] sm:$0xff]
  %v108 = vld [vmem:[%s2 + $0x20] sm:$0xff]
  %v109 = vld [vmem:[%s2 + $0x28] sm:$0xff]
  %v110 = vld [vmem:[%s2 + $0x30] sm:$0xff]
  %v111 = vld [vmem:[%s2 + $0x38] sm:$0xff]
  %v112 = vld [vmem:[%s2 + $0x40] sm:$0xff]
  %v113 = vld [vmem:[%s2 + $0x48] sm:$0xff]
  %v114 = vld [vmem:[%s2 + $0x50] sm:$0xff]
  %v115 = vld [vmem:[%s2 + $0x58] sm:$0xff]
  %v116 = vld [vmem:[%s2 + $0x60] sm:$0xff]
  %v117 = vld [vmem:[%s2 + $0x68] sm:$0xff]
  %v118 = vld [vmem:[%s2 + $0x70] sm:$0xff]
  %v119 = vld [vmem:[%s2 + $0x78] sm:$0xff]
  %v120 = vld [vmem:[%s2 + $0x80] sm:$0xff]
  %v121 = vld [vmem:[%s2 + $0x88] sm:$0xff]
  %v122 = vld [vmem:[%s2 + $0x90] sm:$0xff]
  %v123 = vld [vmem:[%s2 + $0x98] sm:$0xff]
  %v124 = vld [vmem:[%s2 + $0xa0] sm:$0xff]
  %v125 = vld [vmem:[%s2 + $0xa8] sm:$0xff]
  %v126 = vld [vmem:[%s2 + $0xb0] sm:$0xff]
  %v127 = vld [vmem:[%s2 + $0xb8] sm:$0x3]
  %129 = vset.pattern.permute.xlu0 0
  %130 = vperm.xlu0 %129, %v104
  %v131 = vpop.permute.xlu0 %130
  %134 = vset.pattern.permute.xlu0 0
  %135 = vperm.xlu0 %134, %v105
  %v136 = vpop.permute.xlu0 %135
  %139 = vset.pattern.permute.xlu0 0
  %140 = vperm.xlu0 %139, %v106
  %v141 = vpop.permute.xlu0 %140
  %144 = vset.pattern.permute.xlu0 0
  %145 = vperm.xlu0 %144, %v107
  %v146 = vpop.permute.xlu0 %145
  %149 = vset.pattern.permute.xlu0 0
  %150 = vperm.xlu0 %149, %v108
  %v151 = vpop.permute.xlu0 %150
  %154 = vset.pattern.permute.xlu0 0
  %155 = vperm.xlu0 %154, %v109
  %v156 = vpop.permute.xlu0 %155
  %159 = vset.pattern.permute.xlu0 0
  %160 = vperm.xlu0 %159, %v110
  %v161 = vpop.permute.xlu0 %160
  %164 = vset.pattern.permute.xlu0 0
  %165 = vperm.xlu0 %164, %v111
  %v166 = vpop.permute.xlu0 %165
  %169 = vset.pattern.permute.xlu0 0
  %170 = vperm.xlu0 %169, %v112
  %v171 = vpop.permute.xlu0 %170
  %174 = vset.pattern.permute.xlu0 0
  %175 = vperm.xlu0 %174, %v113
  %v176 = vpop.permute.xlu0 %175
  %179 = vset.pattern.permute.xlu0 0
  %180 = vperm.xlu0 %179, %v114
  %v181 = vpop.permute.xlu0 %180
  %184 = vset.pattern.permute.xlu0 0
  %185 = vperm.xlu0 %184, %v115
  %v186 = vpop.permute.xlu0 %185
  %189 = vset.pattern.permute.xlu0 0
  %190 = vperm.xlu0 %189, %v116
  %v191 = vpop.permute.xlu0 %190
  %194 = vset.pattern.permute.xlu0 0
  %195 = vperm.xlu0 %194, %v117
  %v196 = vpop.permute.xlu0 %195
  %199 = vset.pattern.permute.xlu0 0
  %200 = vperm.xlu0 %199, %v118
  %v201 = vpop.permute.xlu0 %200
  %204 = vset.pattern.permute.xlu0 0
  %205 = vperm.xlu0 %204, %v119
  %v206 = vpop.permute.xlu0 %205
  %209 = vset.pattern.permute.xlu0 0
  %210 = vperm.xlu0 %209, %v120
  %v211 = vpop.permute.xlu0 %210
  %214 = vset.pattern.permute.xlu0 0
  %215 = vperm.xlu0 %214, %v121
  %v216 = vpop.permute.xlu0 %215
  %219 = vset.pattern.permute.xlu0 0
  %220 = vperm.xlu0 %219, %v122
  %v221 = vpop.permute.xlu0 %220
  %224 = vset.pattern.permute.xlu0 0
  %225 = vperm.xlu0 %224, %v123
  %v226 = vpop.permute.xlu0 %225
  %229 = vset.pattern.permute.xlu0 0
  %230 = vperm.xlu0 %229, %v124
  %v231 = vpop.permute.xlu0 %230
  %234 = vset.pattern.permute.xlu0 0
  %235 = vperm.xlu0 %234, %v125
  %v236 = vpop.permute.xlu0 %235
  %239 = vset.pattern.permute.xlu0 0
  %240 = vperm.xlu0 %239, %v126
  %v241 = vpop.permute.xlu0 %240
  %244 = vset.pattern.permute.xlu0 0
  %245 = vperm.xlu0 %244, %v127
  %v246 = vpop.permute.xlu0 %245
  %vm248 = vcmask 523264
  %v250 = vsel %vm248, %v33, 0
  %v253 = vsel %vm248, %v35, 0
  %v256 = vsel %vm248, %v37, 0
  %v259 = vsel %vm248, %v39, 0
  %v262 = vsel %vm248, %v41, 0
  %v265 = vsel %vm248, %v43, 0
  %v268 = vsel %vm248, %v45, 0
  %v271 = vsel %vm248, %v47, 0
  %v274 = vsel %vm248, %v49, 0
  %v277 = vsel %vm248, %v51, 0
  %v280 = vsel %vm248, %v53, 0
  %v283 = vsel %vm248, %v55, 0
  %v286 = vsel %vm248, %v57, 0
  %v289 = vsel %vm248, %v59, 0
  %v292 = vsel %vm248, %v61, 0
  %v295 = vsel %vm248, %v63, 0
  %v298 = vsel %vm248, %v65, 0
  %v301 = vsel %vm248, %v67, 0
  %v304 = vsel %vm248, %v69, 0
  %v307 = vsel %vm248, %v71, 0
  %v310 = vsel %vm248, %v73, 0
  %v313 = vsel %vm248, %v75, 0
  %v316 = vsel %vm248, %v77, 0
  %v319 = vsel %vm248, %v79, 0
  %321 = vmatprep.subr.mxu0 0.0
  %322 = vmatpush1.msra.mxu0 %v80
  %323 = vmatprep.subr.mxu0 0.0
  %324 = vmatpush1.msra.mxu0 %v81
  %325 = vmatprep.subr.mxu0 0.0
  %326 = vmatpush1.msra.mxu0 %v82
  %327 = vmatprep.subr.mxu0 0.0
  %328 = vmatpush1.msra.mxu0 %v83
  %329 = vmatprep.subr.mxu0 0.0
  %330 = vmatpush1.msra.mxu0 %v84
  %331 = vmatprep.subr.mxu0 0.0
  %332 = vmatpush1.msra.mxu0 %v85
  %333 = vmatprep.subr.mxu0 0.0
  %334 = vmatpush1.msra.mxu0 %v86
  %335 = vmatprep.subr.mxu0 0.0
  %336 = vmatpush1.msra.mxu0 %v87
  %337 = vmatprep.subr.mxu0 0.0
  %338 = vmatpush1.msra.mxu0 %v88
  %339 = vmatprep.subr.mxu0 0.0
  %340 = vmatpush1.msra.mxu0 %v89
  %341 = vmatprep.subr.mxu0 0.0
  %342 = vmatpush1.msra.mxu0 %v90
  %343 = vmatprep.subr.mxu0 0.0
  %344 = vmatpush1.msra.mxu0 %v91
  %345 = vmatprep.subr.mxu0 0.0
  %346 = vmatpush1.msra.mxu0 %v92
  %347 = vmatprep.subr.mxu0 0.0
  %348 = vmatpush1.msra.mxu0 %v93
  %349 = vmatprep.subr.mxu0 0.0
  %350 = vmatpush1.msra.mxu0 %v94
  %351 = vmatprep.subr.mxu0 0.0
  %352 = vmatpush1.msra.mxu0 %v95
  %353 = vmatprep.subr.mxu0 0.0
  %354 = vmatpush1.msra.mxu0 %v96
  %355 = vmatprep.subr.mxu0 0.0
  %356 = vmatpush1.msra.mxu0 %v97
  %357 = vmatprep.subr.mxu0 0.0
  %358 = vmatpush1.msra.mxu0 %v98
  %359 = vmatprep.subr.mxu0 0.0
  %360 = vmatpush1.msra.mxu0 %v99
  %361 = vmatprep.subr.mxu0 0.0
  %362 = vmatpush1.msra.mxu0 %v100
  %363 = vmatprep.subr.mxu0 0.0
  %364 = vmatpush1.msra.mxu0 %v101
  %365 = vmatprep.subr.mxu0 0.0
  %366 = vmatpush1.msra.mxu0 %v102
  %367 = vmatprep.subr.mxu0 0.0
  %368 = vmatpush1.msra.mxu0 %v103
  %369 = vmatprep.subr.mxu0 0.0
  %370 = vmatpush1.msra.mxu0 0.0
  %371 = vmatprep.subr.mxu0 0.0
  %372 = vmatpush1.msra.mxu0 0.0
  %373 = vmatprep.subr.mxu0 0.0
  %374 = vmatpush1.msra.mxu0 0.0
  %375 = vmatprep.subr.mxu0 0.0
  %376 = vmatpush1.msra.mxu0 0.0
  %377 = vmatprep.subr.mxu0 0.0
  %378 = vmatpush1.msra.mxu0 0.0
  %379 = vmatprep.subr.mxu0 0.0
  %380 = vmatpush1.msra.mxu0 0.0
  %381 = vmatprep.subr.mxu0 0.0
  %382 = vmatpush1.msra.mxu0 0.0
  %383 = vmatprep.subr.mxu0 0.0
  %384 = vmatpush1.msra.mxu0 0.0
  %385 = vmatprep.mubr.f32.mxu0 %v250
  %386 = vmatmul.mubr.f32.gmra.mrb[0].mxu0 %v32
  %v387 = vpop.f32.mrb[0].mxu0
  %v388 = vadd.f32 %v131, %v387
  %v389 = vpop.f32.mrb[0].mxu0
  %390 = vmatprep.mubr.f32.mxu0 %v253
  %391 = vmatmul.mubr.f32.gmra.mrb[0].mxu0 %v34
  %v392 = vpop.f32.mrb[0].mxu0
  %v393 = vadd.f32 %v136, %v392
  %v394 = vpop.f32.mrb[0].mxu0
  %395 = vmatprep.mubr.f32.mxu0 %v256
  %396 = vmatmul.mubr.f32.gmra.mrb[0].mxu0 %v36
  %v397 = vpop.f32.mrb[0].mxu0
  %v398 = vadd.f32 %v141, %v397
  %v399 = vpop.f32.mrb[0].mxu0
  %400 = vmatprep.mubr.f32.mxu0 %v259
  %401 = vmatmul.mubr.f32.gmra.mrb[0].mxu0 %v38
  %v402 = vpop.f32.mrb[0].mxu0
  %v403 = vadd.f32 %v146, %v402
  %v404 = vpop.f32.mrb[0].mxu0
  %405 = vmatprep.mubr.f32.mxu0 %v262
  %406 = vmatmul.mubr.f32.gmra.mrb[0].mxu0 %v40
  %v407 = vpop.f32.mrb[0].mxu0
  %v408 = vadd.f32 %v151, %v407
  %v409 = vpop.f32.mrb[0].mxu0
  %410 = vmatprep.mubr.f32.mxu0 %v265
  %411 = vmatmul.mubr.f32.gmra.mrb[0].mxu0 %v42
  %v412 = vpop.f32.mrb[0].mxu0
  %v413 = vadd.f32 %v156, %v412
  %v414 = vpop.f32.mrb[0].mxu0
  %415 = vmatprep.mubr.f32.mxu0 %v268
  %416 = vmatmul.mubr.f32.gmra.mrb[0].mxu0 %v44
  %v417 = vpop.f32.mrb[0].mxu0
  %v418 = vadd.f32 %v161, %v417
  %v419 = vpop.f32.mrb[0].mxu0
  %420 = vmatprep.mubr.f32.mxu0 %v271
  %421 = vmatmul.mubr.f32.gmra.mrb[0].mxu0 %v46
  %v422 = vpop.f32.mrb[0].mxu0
  %v423 = vadd.f32 %v166, %v422
  %v424 = vpop.f32.mrb[0].mxu0
  %425 = vmatprep.mubr.f32.mxu0 %v274
  %426 = vmatmul.mubr.f32.gmra.mrb[0].mxu0 %v48
  %v427 = vpop.f32.mrb[0].mxu0
  %v428 = vadd.f32 %v171, %v427
  %v429 = vpop.f32.mrb[0].mxu0
  %430 = vmatprep.mubr.f32.mxu0 %v277
  %431 = vmatmul.mubr.f32.gmra.mrb[0].mxu0 %v50
  %v432 = vpop.f32.mrb[0].mxu0
  %v433 = vadd.f32 %v176, %v432
  %v434 = vpop.f32.mrb[0].mxu0
  %435 = vmatprep.mubr.f32.mxu0 %v280
  %436 = vmatmul.mubr.f32.gmra.mrb[0].mxu0 %v52
  %v437 = vpop.f32.mrb[0].mxu0
  %v438 = vadd.f32 %v181, %v437
  %v439 = vpop.f32.mrb[0].mxu0
  %440 = vmatprep.mubr.f32.mxu0 %v283
  %441 = vmatmul.mubr.f32.gmra.mrb[0].mxu0 %v54
  %v442 = vpop.f32.mrb[0].mxu0
  %v443 = vadd.f32 %v186, %v442
  %v444 = vpop.f32.mrb[0].mxu0
  %445 = vmatprep.mubr.f32.mxu0 %v286
  %446 = vmatmul.mubr.f32.gmra.mrb[0].mxu0 %v56
  %v447 = vpop.f32.mrb[0].mxu0
  %v448 = vadd.f32 %v191, %v447
  %v449 = vpop.f32.mrb[0].mxu0
  %450 = vmatprep.mubr.f32.mxu0 %v289
  %451 = vmatmul.mubr.f32.gmra.mrb[0].mxu0 %v58
  %v452 = vpop.f32.mrb[0].mxu0
  %v453 = vadd.f32 %v196, %v452
  %v454 = vpop.f32.mrb[0].mxu0
  %455 = vmatprep.mubr.f32.mxu0 %v292
  %456 = vmatmul.mubr.f32.gmra.mrb[0].mxu0 %v60
  %v457 = vpop.f32.mrb[0].mxu0
  %v458 = vadd.f32 %v201, %v457
  %v459 = vpop.f32.mrb[0].mxu0
  %460 = vmatprep.mubr.f32.mxu0 %v295
  %461 = vmatmul.mubr.f32.gmra.mrb[0].mxu0 %v62
  %v462 = vpop.f32.mrb[0].mxu0
  %v463 = vadd.f32 %v206, %v462
  %v464 = vpop.f32.mrb[0].mxu0
  %465 = vmatprep.mubr.f32.mxu0 %v298
  %466 = vmatmul.mubr.f32.gmra.mrb[0].mxu0 %v64
  %v467 = vpop.f32.mrb[0].mxu0
  %v468 = vadd.f32 %v211, %v467
  %v469 = vpop.f32.mrb[0].mxu0
  %470 = vmatprep.mubr.f32.mxu0 %v301
  %471 = vmatmul.mubr.f32.gmra.mrb[0].mxu0 %v66
  %v472 = vpop.f32.mrb[0].mxu0
  %v473 = vadd.f32 %v216, %v472
  %v474 = vpop.f32.mrb[0].mxu0
  %475 = vmatprep.mubr.f32.mxu0 %v304
  %476 = vmatmul.mubr.f32.gmra.mrb[0].mxu0 %v68
  %v477 = vpop.f32.mrb[0].mxu0
  %v478 = vadd.f32 %v221, %v477
  %v479 = vpop.f32.mrb[0].mxu0
  %480 = vmatprep.mubr.f32.mxu0 %v307
  %481 = vmatmul.mubr.f32.gmra.mrb[0].mxu0 %v70
  %v482 = vpop.f32.mrb[0].mxu0
  %v483 = vadd.f32 %v226, %v482
  %v484 = vpop.f32.mrb[0].mxu0
  %485 = vmatprep.mubr.f32.mxu0 %v310
  %486 = vmatmul.mubr.f32.gmra.mrb[0].mxu0 %v72
  %v487 = vpop.f32.mrb[0].mxu0
  %v488 = vadd.f32 %v231, %v487
  %v489 = vpop.f32.mrb[0].mxu0
  %490 = vmatprep.mubr.f32.mxu0 %v313
  %491 = vmatmul.mubr.f32.gmra.mrb[0].mxu0 %v74
  %v492 = vpop.f32.mrb[0].mxu0
  %v493 = vadd.f32 %v236, %v492
  %v494 = vpop.f32.mrb[0].mxu0
  %495 = vmatprep.mubr.f32.mxu0 %v316
  %496 = vmatmul.mubr.f32.gmra.mrb[0].mxu0 %v76
  %v497 = vpop.f32.mrb[0].mxu0
  %v498 = vadd.f32 %v241, %v497
  %v499 = vpop.f32.mrb[0].mxu0
  %500 = vmatprep.mubr.f32.mxu0 %v319
  %501 = vmatmul.mubr.f32.gmra.mrb[0].mxu0 %v78
  %v502 = vpop.f32.mrb[0].mxu0
  %v503 = vadd.f32 %v246, %v502
  %v504 = vpop.f32.mrb[0].mxu0
  %505 = vdwg.mxu0
  %v506 = vmax.f32 %v388, 0.0
  %v507 = vmax.f32 %v393, 0.0
  %v508 = vmax.f32 %v398, 0.0
  %v509 = vmax.f32 %v403, 0.0
  %v510 = vmax.f32 %v408, 0.0
  %v511 = vmax.f32 %v413, 0.0
  %v512 = vmax.f32 %v418, 0.0
  %v513 = vmax.f32 %v423, 0.0
  %v514 = vmax.f32 %v428, 0.0
  %v515 = vmax.f32 %v433, 0.0
  %v516 = vmax.f32 %v438, 0.0
  %v517 = vmax.f32 %v443, 0.0
  %v518 = vmax.f32 %v448, 0.0
  %v519 = vmax.f32 %v453, 0.0
  %v520 = vmax.f32 %v458, 0.0
  %v521 = vmax.f32 %v463, 0.0
  %v522 = vmax.f32 %v468, 0.0
  %v523 = vmax.f32 %v473, 0.0
  %v524 = vmax.f32 %v478, 0.0
  %v525 = vmax.f32 %v483, 0.0
  %v526 = vmax.f32 %v488, 0.0
  %v527 = vmax.f32 %v493, 0.0
  %v528 = vmax.f32 %v498, 0.0
  %v529 = vmax.f32 %v503, 0.0
  %vm554 = vcmask 1046528
  %v555 = vrot.slane %v506, 1
  %v556 = vrot.slane %v507, 1
  %v557 = vsel %vm554, %v555, %v556
  %v558 = vrot.slane %v508, 1
  %v559 = vsel %vm554, %v556, %v558
  %v560 = vrot.slane %v509, 1
  %v561 = vsel %vm554, %v558, %v560
  %v562 = vrot.slane %v510, 1
  %v563 = vsel %vm554, %v560, %v562
  %v564 = vrot.slane %v511, 1
  %v565 = vsel %vm554, %v562, %v564
  %v566 = vrot.slane %v512, 1
  %v567 = vsel %vm554, %v564, %v566
  %v568 = vrot.slane %v513, 1
  %v569 = vsel %vm554, %v566, %v568
  %v570 = vrot.slane %v514, 1
  %v571 = vsel %vm554, %v568, %v570
  %v572 = vrot.slane %v515, 1
  %v573 = vsel %vm554, %v570, %v572
  %v574 = vrot.slane %v516, 1
  %v575 = vsel %vm554, %v572, %v574
  %v576 = vrot.slane %v517, 1
  %v577 = vsel %vm554, %v574, %v576
  %v578 = vrot.slane %v518, 1
  %v579 = vsel %vm554, %v576, %v578
  %v580 = vrot.slane %v519, 1
  %v581 = vsel %vm554, %v578, %v580
  %v582 = vrot.slane %v520, 1
  %v583 = vsel %vm554, %v580, %v582
  %v584 = vrot.slane %v521, 1
  %v585 = vsel %vm554, %v582, %v584
  %v586 = vrot.slane %v522, 1
  %v587 = vsel %vm554, %v584, %v586
  %v588 = vrot.slane %v523, 1
  %v589 = vsel %vm554, %v586, %v588
  %v590 = vrot.slane %v524, 1
  %v591 = vsel %vm554, %v588, %v590
  %v592 = vrot.slane %v525, 1
  %v593 = vsel %vm554, %v590, %v592
  %v594 = vrot.slane %v526, 1
  %v595 = vsel %vm554, %v592, %v594
  %v596 = vrot.slane %v527, 1
  %v597 = vsel %vm554, %v594, %v596
  %v598 = vrot.slane %v528, 1
  %v599 = vsel %vm554, %v596, %v598
  %v600 = vrot.slane %v529, 1
  %v601 = vsel %vm554, %v598, %v600
  %v626 = vmax.f32 %v506, %v557
  %v627 = vmax.f32 %v507, %v559
  %v628 = vmax.f32 %v508, %v561
  %v629 = vmax.f32 %v509, %v563
  %v630 = vmax.f32 %v510, %v565
  %v631 = vmax.f32 %v511, %v567
  %v632 = vmax.f32 %v512, %v569
  %v633 = vmax.f32 %v513, %v571
  %v634 = vmax.f32 %v514, %v573
  %v635 = vmax.f32 %v515, %v575
  %v636 = vmax.f32 %v516, %v577
  %v637 = vmax.f32 %v517, %v579
  %v638 = vmax.f32 %v518, %v581
  %v639 = vmax.f32 %v519, %v583
  %v640 = vmax.f32 %v520, %v585
  %v641 = vmax.f32 %v521, %v587
  %v642 = vmax.f32 %v522, %v589
  %v643 = vmax.f32 %v523, %v591
  %v644 = vmax.f32 %v524, %v593
  %v645 = vmax.f32 %v525, %v595
  %v646 = vmax.f32 %v526, %v597
  %v647 = vmax.f32 %v527, %v599
  %v648 = vmax.f32 %v528, %v601
  %v649 = vmax.f32 %v529, %v600
  %674 = vrot.lane.b32.xlu0 %v626, 127
  %v675 = vpop.permute.xlu0 %674
  %676 = vrot.lane.b32.xlu0 %v627, 127
  %v677 = vpop.permute.xlu0 %676
  %678 = vrot.lane.b32.xlu0 %v628, 127
  %v679 = vpop.permute.xlu0 %678
  %680 = vrot.lane.b32.xlu0 %v629, 127
  %v681 = vpop.permute.xlu0 %680
  %682 = vrot.lane.b32.xlu0 %v630, 127
  %v683 = vpop.permute.xlu0 %682
  %684 = vrot.lane.b32.xlu0 %v631, 127
  %v685 = vpop.permute.xlu0 %684
  %686 = vrot.lane.b32.xlu0 %v632, 127
  %v687 = vpop.permute.xlu0 %686
  %688 = vrot.lane.b32.xlu0 %v633, 127
  %v689 = vpop.permute.xlu0 %688
  %690 = vrot.lane.b32.xlu0 %v634, 127
  %v691 = vpop.permute.xlu0 %690
  %692 = vrot.lane.b32.xlu0 %v635, 127
  %v693 = vpop.permute.xlu0 %692
  %694 = vrot.lane.b32.xlu0 %v636, 127
  %v695 = vpop.permute.xlu0 %694
  %696 = vrot.lane.b32.xlu0 %v637, 127
  %v697 = vpop.permute.xlu0 %696
  %698 = vrot.lane.b32.xlu0 %v638, 127
  %v699 = vpop.permute.xlu0 %698
  %700 = vrot.lane.b32.xlu0 %v639, 127
  %v701 = vpop.permute.xlu0 %700
  %702 = vrot.lane.b32.xlu0 %v640, 127
  %v703 = vpop.permute.xlu0 %702
  %704 = vrot.lane.b32.xlu0 %v641, 127
  %v705 = vpop.permute.xlu0 %704
  %706 = vrot.lane.b32.xlu0 %v642, 127
  %v707 = vpop.permute.xlu0 %706
  %708 = vrot.lane.b32.xlu0 %v643, 127
  %v709 = vpop.permute.xlu0 %708
  %710 = vrot.lane.b32.xlu0 %v644, 127
  %v711 = vpop.permute.xlu0 %710
  %712 = vrot.lane.b32.xlu0 %v645, 127
  %v713 = vpop.permute.xlu0 %712
  %714 = vrot.lane.b32.xlu0 %v646, 127
  %v715 = vpop.permute.xlu0 %714
  %716 = vrot.lane.b32.xlu0 %v647, 127
  %v717 = vpop.permute.xlu0 %716
  %718 = vrot.lane.b32.xlu0 %v648, 127
  %v719 = vpop.permute.xlu0 %718
  %720 = vrot.lane.b32.xlu0 %v649, 127
  %v721 = vpop.permute.xlu0 %720
  %v746 = vmax.f32 %v626, %v675
  %v747 = vmax.f32 %v627, %v677
  %v748 = vmax.f32 %v628, %v679
  %v749 = vmax.f32 %v629, %v681
  %v750 = vmax.f32 %v630, %v683
  %v751 = vmax.f32 %v631, %v685
  %v752 = vmax.f32 %v632, %v687
  %v753 = vmax.f32 %v633, %v689
  %v754 = vmax.f32 %v634, %v691
  %v755 = vmax.f32 %v635, %v693
  %v756 = vmax.f32 %v636, %v695
  %v757 = vmax.f32 %v637, %v697
  %v758 = vmax.f32 %v638, %v699
  %v759 = vmax.f32 %v639, %v701
  %v760 = vmax.f32 %v640, %v703
  %v761 = vmax.f32 %v641, %v705
  %v762 = vmax.f32 %v642, %v707
  %v763 = vmax.f32 %v643, %v709
  %v764 = vmax.f32 %v644, %v711
  %v765 = vmax.f32 %v645, %v713
  %v766 = vmax.f32 %v646, %v715
  %v767 = vmax.f32 %v647, %v717
  %v768 = vmax.f32 %v648, %v719
  %v769 = vmax.f32 %v649, %v721
  %v770 = vld [vmem:[%s3] sm:$0xff]
  %v771 = vld [vmem:[%s3 + $0x8] sm:$0xff]
  %v772 = vld [vmem:[%s3 + $0x10] sm:$0xff]
  %v773 = vld [vmem:[%s3 + $0x18] sm:$0xff]
  %v774 = vld [vmem:[%s3 + $0x20] sm:$0xff]
  %v775 = vld [vmem:[%s3 + $0x28] sm:$0xff]
  %v776 = vld [vmem:[%s3 + $0x30] sm:$0xff]
  %v777 = vld [vmem:[%s3 + $0x38] sm:$0xff]
  %v778 = vld [vmem:[%s3 + $0x40] sm:$0xff]
  %v779 = vld [vmem:[%s3 + $0x48] sm:$0xff]
  %v780 = vld [vmem:[%s3 + $0x50] sm:$0xff]
  %v781 = vld [vmem:[%s3 + $0x58] sm:$0xff]
  %v782 = vld [vmem:[%s3 + $0x60] sm:$0xff]
  %v783 = vld [vmem:[%s3 + $0x68] sm:$0xff]
  %v784 = vld [vmem:[%s3 + $0x70] sm:$0xff]
  %v785 = vld [vmem:[%s3 + $0x78] sm:$0xff]
  %v786 = vld [vmem:[%s3 + $0x80] sm:$0xff]
  %v787 = vld [vmem:[%s3 + $0x88] sm:$0xff]
  %v788 = vld [vmem:[%s3 + $0x90] sm:$0xff]
  %v789 = vld [vmem:[%s3 + $0x98] sm:$0xff]
  %v790 = vld [vmem:[%s3 + $0xa0] sm:$0xff]
  %v791 = vld [vmem:[%s3 + $0xa8] sm:$0xff]
  %v792 = vld [vmem:[%s3 + $0xb0] sm:$0xff]
  %v793 = vld [vmem:[%s3 + $0xb8] sm:$0xff]
  %v794 = vld [vmem:[%s3 + $0xc0] sm:$0xff]
  %v795 = vld [vmem:[%s3 + $0xc8] sm:$0xff]
  %v796 = vld [vmem:[%s3 + $0xd0] sm:$0xff]
  %v797 = vld [vmem:[%s3 + $0xd8] sm:$0xff]
  %v798 = vld [vmem:[%s3 + $0xe0] sm:$0xff]
  %v799 = vld [vmem:[%s3 + $0xe8] sm:$0xff]
  %v800 = vld [vmem:[%s3 + $0xf0] sm:$0xff]
  %v801 = vld [vmem:[%s3 + $0xf8] sm:$0xff]
  %v802 = vld [vmem:[%s3 + $0x100] sm:$0xff]
  %v803 = vld [vmem:[%s3 + $0x108] sm:$0xff]
  %v804 = vld [vmem:[%s3 + $0x110] sm:$0xff]
  %v805 = vld [vmem:[%s3 + $0x118] sm:$0xff]
  %v806 = vld [vmem:[%s3 + $0x120] sm:$0xff]
  %v807 = vld [vmem:[%s3 + $0x128] sm:$0xff]
  %v808 = vld [vmem:[%s3 + $0x130] sm:$0xff]
  %v809 = vld [vmem:[%s3 + $0x138] sm:$0xff]
  %v810 = vld [vmem:[%s3 + $0x140] sm:$0xff]
  %v811 = vld [vmem:[%s3 + $0x148] sm:$0xff]
  %vm812 = vcmask 465920
  %v814 = vsel %vm812, %v771, 0
  %v817 = vsel %vm812, %v773, 0
  %v820 = vsel %vm812, %v775, 0
  %v823 = vsel %vm812, %v777, 0
  %v826 = vsel %vm812, %v779, 0
  %v829 = vsel %vm812, %v781, 0
  %v832 = vsel %vm812, %v783, 0
  %v835 = vsel %vm812, %v785, 0
  %v838 = vsel %vm812, %v787, 0
  %v841 = vsel %vm812, %v789, 0
  %v844 = vsel %vm812, %v791, 0
  %v847 = vsel %vm812, %v793, 0
  %v850 = vsel %vm812, %v795, 0
  %v853 = vsel %vm812, %v797, 0
  %v856 = vsel %vm812, %v799, 0
  %v859 = vsel %vm812, %v801, 0
  %v862 = vsel %vm812, %v803, 0
  %v865 = vsel %vm812, %v805, 0
  %v868 = vsel %vm812, %v807, 0
  %v871 = vsel %vm812, %v809, 0
  %v874 = vsel %vm812, %v811, 0
  %vm876 = vcmask 1040384
  %v878 = vsel %vm876, %v769, 0
  %880 = vmatprep.subr.mxu0 0.0
  %881 = vmatpush1.msra.mxu0 %v746
  %882 = vmatprep.subr.mxu0 0.0
  %883 = vmatpush1.msra.mxu0 %v747
  %884 = vmatprep.subr.mxu0 0.0
  %885 = vmatpush1.msra.mxu0 %v748
  %886 = vmatprep.subr.mxu0 0.0
  %887 = vmatpush1.msra.mxu0 %v749
  %888 = vmatprep.subr.mxu0 0.0
  %889 = vmatpush1.msra.mxu0 %v750
  %890 = vmatprep.subr.mxu0 0.0
  %891 = vmatpush1.msra.mxu0 %v751
  %892 = vmatprep.subr.mxu0 0.0
  %893 = vmatpush1.msra.mxu0 %v752
  %894 = vmatprep.subr.mxu0 0.0
  %895 = vmatpush1.msra.mxu0 %v753
  %896 = vmatprep.subr.mxu0 0.0
  %897 = vmatpush1.msra.mxu0 %v754
  %898 = vmatprep.subr.mxu0 0.0
  %899 = vmatpush1.msra.mxu0 %v755
  %900 = vmatprep.subr.mxu0 0.0
  %901 = vmatpush1.msra.mxu0 %v756
  %902 = vmatprep.subr.mxu0 0.0
  %903 = vmatpush1.msra.mxu0 %v757
  %904 = vmatprep.subr.mxu0 0.0
  %905 = vmatpush1.msra.mxu0 %v758
  %906 = vmatprep.subr.mxu0 0.0
  %907 = vmatpush1.msra.mxu0 %v759
  %908 = vmatprep.subr.mxu0 0.0
  %909 = vmatpush1.msra.mxu0 %v760
  %910 = vmatprep.subr.mxu0 0.0
  %911 = vmatpush1.msra.mxu0 %v761
  %912 = vmatprep.subr.mxu0 0.0
  %913 = vmatpush1.msra.mxu0 %v762
  %914 = vmatprep.subr.mxu0 0.0
  %915 = vmatpush1.msra.mxu0 %v763
  %916 = vmatprep.subr.mxu0 0.0
  %917 = vmatpush1.msra.mxu0 %v764
  %918 = vmatprep.subr.mxu0 0.0
  %919 = vmatpush1.msra.mxu0 %v765
  %920 = vmatprep.subr.mxu0 0.0
  %921 = vmatpush1.msra.mxu0 %v766
  %922 = vmatprep.subr.mxu0 0.0
  %923 = vmatpush1.msra.mxu0 %v767
  %924 = vmatprep.subr.mxu0 0.0
  %925 = vmatpush1.msra.mxu0 %v768
  %926 = vmatprep.subr.mxu0 0.0
  %927 = vmatpush1.msra.mxu0 %v878
  %928 = vmatprep.subr.mxu0 0.0
  %929 = vmatpush1.msra.mxu0 0.0
  %930 = vmatprep.subr.mxu0 0.0
  %931 = vmatpush1.msra.mxu0 0.0
  %932 = vmatprep.subr.mxu0 0.0
  %933 = vmatpush1.msra.mxu0 0.0
  %934 = vmatprep.subr.mxu0 0.0
  %935 = vmatpush1.msra.mxu0 0.0
  %936 = vmatprep.subr.mxu0 0.0
  %937 = vmatpush1.msra.mxu0 0.0
  %938 = vmatprep.subr.mxu0 0.0
  %939 = vmatpush1.msra.mxu0 0.0
  %940 = vmatprep.subr.mxu0 0.0
  %941 = vmatpush1.msra.mxu0 0.0
  %942 = vmatprep.subr.mxu0 0.0
  %943 = vmatpush1.msra.mxu0 0.0
  %944 = vmatprep.mubr.f32.mxu0 %v814
  %945 = vmatmul.mubr.f32.gmra.mrb[0].mxu0 %v770
  %v946 = vpop.f32.mrb[0].mxu0
  %v947 = vadd.f32 0.0, %v946
  %v948 = vpop.f32.mrb[0].mxu0
  %949 = vmatprep.mubr.f32.mxu0 %v817
  %950 = vmatmul.mubr.f32.gmra.mrb[0].mxu0 %v772
  %v951 = vpop.f32.mrb[0].mxu0
  %v952 = vadd.f32 0.0, %v951
  %v953 = vpop.f32.mrb[0].mxu0
  %954 = vmatprep.mubr.f32.mxu0 %v820
  %955 = vmatmul.mubr.f32.gmra.mrb[0].mxu0 %v774
  %v956 = vpop.f32.mrb[0].mxu0
  %v957 = vadd.f32 0.0, %v956
  %v958 = vpop.f32.mrb[0].mxu0
  %959 = vmatprep.mubr.f32.mxu0 %v823
  %960 = vmatmul.mubr.f32.gmra.mrb[0].mxu0 %v776
  %v961 = vpop.f32.mrb[0].mxu0
  %v962 = vadd.f32 0.0, %v961
  %v963 = vpop.f32.mrb[0].mxu0
  %964 = vmatprep.mubr.f32.mxu0 %v826
  %965 = vmatmul.mubr.f32.gmra.mrb[0].mxu0 %v778
  %v966 = vpop.f32.mrb[0].mxu0
  %v967 = vadd.f32 0.0, %v966
  %v968 = vpop.f32.mrb[0].mxu0
  %969 = vmatprep.mubr.f32.mxu0 %v829
  %970 = vmatmul.mubr.f32.gmra.mrb[0].mxu0 %v780
  %v971 = vpop.f32.mrb[0].mxu0
  %v972 = vadd.f32 0.0, %v971
  %v973 = vpop.f32.mrb[0].mxu0
  %974 = vmatprep.mubr.f32.mxu0 %v832
  %975 = vmatmul.mubr.f32.gmra.mrb[0].mxu0 %v782
  %v976 = vpop.f32.mrb[0].mxu0
  %v977 = vadd.f32 0.0, %v976
  %v978 = vpop.f32.mrb[0].mxu0
  %979 = vmatprep.mubr.f32.mxu0 %v835
  %980 = vmatmul.mubr.f32.gmra.mrb[0].mxu0 %v784
  %v981 = vpop.f32.mrb[0].mxu0
  %v982 = vadd.f32 0.0, %v981
  %v983 = vpop.f32.mrb[0].mxu0
  %984 = vmatprep.mubr.f32.mxu0 %v838
  %985 = vmatmul.mubr.f32.gmra.mrb[0].mxu0 %v786
  %v986 = vpop.f32.mrb[0].mxu0
  %v987 = vadd.f32 0.0, %v986
  %v988 = vpop.f32.mrb[0].mxu0
  %989 = vmatprep.mubr.f32.mxu0 %v841
  %990 = vmatmul.mubr.f32.gmra.mrb[0].mxu0 %v788
  %v991 = vpop.f32.mrb[0].mxu0
  %v992 = vadd.f32 0.0, %v991
  %v993 = vpop.f32.mrb[0].mxu0
  %994 = vmatprep.mubr.f32.mxu0 %v844
  %995 = vmatmul.mubr.f32.gmra.mrb[0].mxu0 %v790
  %v996 = vpop.f32.mrb[0].mxu0
  %v997 = vadd.f32 0.0, %v996
  %v998 = vpop.f32.mrb[0].mxu0
  %999 = vmatprep.mubr.f32.mxu0 %v847
  %1000 = vmatmul.mubr.f32.gmra.mrb[0].mxu0 %v792
  %v1001 = vpop.f32.mrb[0].mxu0
  %v1002 = vadd.f32 0.0, %v1001
  %v1003 = vpop.f32.mrb[0].mxu0
  %1004 = vmatprep.mubr.f32.mxu0 %v850
  %1005 = vmatmul.mubr.f32.gmra.mrb[0].mxu0 %v794
  %v1006 = vpop.f32.mrb[0].mxu0
  %v1007 = vadd.f32 0.0, %v1006
  %v1008 = vpop.f32.mrb[0].mxu0
  %1009 = vmatprep.mubr.f32.mxu0 %v853
  %1010 = vmatmul.mubr.f32.gmra.mrb[0].mxu0 %v796
  %v1011 = vpop.f32.mrb[0].mxu0
  %v1012 = vadd.f32 0.0, %v1011
  %v1013 = vpop.f32.mrb[0].mxu0
  %1014 = vmatprep.mubr.f32.mxu0 %v856
  %1015 = vmatmul.mubr.f32.gmra.mrb[0].mxu0 %v798
  %v1016 = vpop.f32.mrb[0].mxu0
  %v1017 = vadd.f32 0.0, %v1016
  %v1018 = vpop.f32.mrb[0].mxu0
  %1019 = vmatprep.mubr.f32.mxu0 %v859
  %1020 = vmatmul.mubr.f32.gmra.mrb[0].mxu0 %v800
  %v1021 = vpop.f32.mrb[0].mxu0
  %v1022 = vadd.f32 0.0, %v1021
  %v1023 = vpop.f32.mrb[0].mxu0
  %1024 = vmatprep.mubr.f32.mxu0 %v862
  %1025 = vmatmul.mubr.f32.gmra.mrb[0].mxu0 %v802
  %v1026 = vpop.f32.mrb[0].mxu0
  %v1027 = vadd.f32 0.0, %v1026
  %v1028 = vpop.f32.mrb[0].mxu0
  %1029 = vmatprep.mubr.f32.mxu0 %v865
  %1030 = vmatmul.mubr.f32.gmra.mrb[0].mxu0 %v804
  %v1031 = vpop.f32.mrb[0].mxu0
  %v1032 = vadd.f32 0.0, %v1031
  %v1033 = vpop.f32.mrb[0].mxu0
  %1034 = vmatprep.mubr.f32.mxu0 %v868
  %1035 = vmatmul.mubr.f32.gmra.mrb[0].mxu0 %v806
  %v1036 = vpop.f32.mrb[0].mxu0
  %v1037 = vadd.f32 0.0, %v1036
  %v1038 = vpop.f32.mrb[0].mxu0
  %1039 = vmatprep.mubr.f32.mxu0 %v871
  %1040 = vmatmul.mubr.f32.gmra.mrb[0].mxu0 %v808
  %v1041 = vpop.f32.mrb[0].mxu0
  %v1042 = vadd.f32 0.0, %v1041
  %v1043 = vpop.f32.mrb[0].mxu0
  %1044 = vmatprep.mubr.f32.mxu0 %v874
  %1045 = vmatmul.mubr.f32.gmra.mrb[0].mxu0 %v810
  %v1046 = vpop.f32.mrb[0].mxu0
  %v1047 = vadd.f32 0.0, %v1046
  %v1048 = vpop.f32.mrb[0].mxu0
  %1049 = vdwg.mxu0
  %s1050 = scalar_lea.vmem %s3, 336
  %v1051 = vld [vmem:[%s1050] sm:$0xff]
  %v1052 = vld [vmem:[%s1050 + $0x8] sm:$0xff]
  %v1053 = vld [vmem:[%s1050 + $0x10] sm:$0xff]
  %v1054 = vld [vmem:[%s1050 + $0x18] sm:$0xff]
  %v1055 = vld [vmem:[%s1050 + $0x20] sm:$0xff]
  %v1056 = vld [vmem:[%s1050 + $0x28] sm:$0xff]
  %v1057 = vld [vmem:[%s1050 + $0x30] sm:$0xff]
  %v1058 = vld [vmem:[%s1050 + $0x38] sm:$0xff]
  %v1059 = vld [vmem:[%s1050 + $0x40] sm:$0xff]
  %v1060 = vld [vmem:[%s1050 + $0x48] sm:$0xff]
  %v1061 = vld [vmem:[%s1050 + $0x50] sm:$0xff]
  %v1062 = vld [vmem:[%s1050 + $0x58] sm:$0xff]
  %v1063 = vld [vmem:[%s1050 + $0x60] sm:$0xff]
  %v1064 = vld [vmem:[%s1050 + $0x68] sm:$0xff]
  %v1065 = vld [vmem:[%s1050 + $0x70] sm:$0xff]
  %v1066 = vld [vmem:[%s1050 + $0x78] sm:$0xff]
  %v1067 = vld [vmem:[%s1050 + $0x80] sm:$0xff]
  %v1068 = vld [vmem:[%s1050 + $0x88] sm:$0xff]
  %v1069 = vld [vmem:[%s1050 + $0x90] sm:$0xff]
  %v1070 = vld [vmem:[%s1050 + $0x98] sm:$0xff]
  %v1071 = vld [vmem:[%s1050 + $0xa0] sm:$0xff]
  %v1072 = vld [vmem:[%s1050 + $0xa8] sm:$0xff]
  %v1073 = vld [vmem:[%s1050 + $0xb0] sm:$0xff]
  %v1074 = vld [vmem:[%s1050 + $0xb8] sm:$0xff]
  %v1075 = vld [vmem:[%s1050 + $0xc0] sm:$0xff]
  %v1076 = vld [vmem:[%s1050 + $0xc8] sm:$0xff]
  %v1077 = vld [vmem:[%s1050 + $0xd0] sm:$0xff]
  %v1078 = vld [vmem:[%s1050 + $0xd8] sm:$0xff]
  %v1079 = vld [vmem:[%s1050 + $0xe0] sm:$0xff]
  %v1080 = vld [vmem:[%s1050 + $0xe8] sm:$0xff]
  %v1081 = vld [vmem:[%s1050 + $0xf0] sm:$0xff]
  %v1082 = vld [vmem:[%s1050 + $0xf8] sm:$0xff]
  %v1083 = vld [vmem:[%s1050 + $0x100] sm:$0xff]
  %v1084 = vld [vmem:[%s1050 + $0x108] sm:$0xff]
  %v1085 = vld [vmem:[%s1050 + $0x110] sm:$0xff]
  %v1086 = vld [vmem:[%s1050 + $0x118] sm:$0xff]
  %v1087 = vld [vmem:[%s1050 + $0x120] sm:$0xff]
  %v1088 = vld [vmem:[%s1050 + $0x128] sm:$0xff]
  %v1089 = vld [vmem:[%s1050 + $0x130] sm:$0xff]
  %v1090 = vld [vmem:[%s1050 + $0x138] sm:$0xff]
  %v1091 = vld [vmem:[%s1050 + $0x140] sm:$0xff]
  %v1092 = vld [vmem:[%s1050 + $0x148] sm:$0xff]
  %v1094 = vsel %vm812, %v1052, 0
  %v1097 = vsel %vm812, %v1054, 0
  %v1100 = vsel %vm812, %v1056, 0
  %v1103 = vsel %vm812, %v1058, 0
  %v1106 = vsel %vm812, %v1060, 0
  %v1109 = vsel %vm812, %v1062, 0
  %v1112 = vsel %vm812, %v1064, 0
  %v1115 = vsel %vm812, %v1066, 0
  %v1118 = vsel %vm812, %v1068, 0
  %v1121 = vsel %vm812, %v1070, 0
  %v1124 = vsel %vm812, %v1072, 0
  %v1127 = vsel %vm812, %v1074, 0
  %v1130 = vsel %vm812, %v1076, 0
  %v1133 = vsel %vm812, %v1078, 0
  %v1136 = vsel %vm812, %v1080, 0
  %v1139 = vsel %vm812, %v1082, 0
  %v1142 = vsel %vm812, %v1084, 0
  %v1145 = vsel %vm812, %v1086, 0
  %v1148 = vsel %vm812, %v1088, 0
  %v1151 = vsel %vm812, %v1090, 0
  %v1154 = vsel %vm812, %v1092, 0
  %1156 = vmatprep.subr.mxu0 0.0
  %1157 = vmatpush1.msra.mxu0 %v746
  %1158 = vmatprep.subr.mxu0 0.0
  %1159 = vmatpush1.msra.mxu0 %v747
  %1160 = vmatprep.subr.mxu0 0.0
  %1161 = vmatpush1.msra.mxu0 %v748
  %1162 = vmatprep.subr.mxu0 0.0
  %1163 = vmatpush1.msra.mxu0 %v749
  %1164 = vmatprep.subr.mxu0 0.0
  %1165 = vmatpush1.msra.mxu0 %v750
  %1166 = vmatprep.subr.mxu0 0.0
  %1167 = vmatpush1.msra.mxu0 %v751
  %1168 = vmatprep.subr.mxu0 0.0
  %1169 = vmatpush1.msra.mxu0 %v752
  %1170 = vmatprep.subr.mxu0 0.0
  %1171 = vmatpush1.msra.mxu0 %v753
  %1172 = vmatprep.subr.mxu0 0.0
  %1173 = vmatpush1.msra.mxu0 %v754
  %1174 = vmatprep.subr.mxu0 0.0
  %1175 = vmatpush1.msra.mxu0 %v755
  %1176 = vmatprep.subr.mxu0 0.0
  %1177 = vmatpush1.msra.mxu0 %v756
  %1178 = vmatprep.subr.mxu0 0.0
  %1179 = vmatpush1.msra.mxu0 %v757
  %1180 = vmatprep.subr.mxu0 0.0
  %1181 = vmatpush1.msra.mxu0 %v758
  %1182 = vmatprep.subr.mxu0 0.0
  %1183 = vmatpush1.msra.mxu0 %v759
  %1184 = vmatprep.subr.mxu0 0.0
  %1185 = vmatpush1.msra.mxu0 %v760
  %1186 = vmatprep.subr.mxu0 0.0
  %1187 = vmatpush1.msra.mxu0 %v761
  %1188 = vmatprep.subr.mxu0 0.0
  %1189 = vmatpush1.msra.mxu0 %v762
  %1190 = vmatprep.subr.mxu0 0.0
  %1191 = vmatpush1.msra.mxu0 %v763
  %1192 = vmatprep.subr.mxu0 0.0
  %1193 = vmatpush1.msra.mxu0 %v764
  %1194 = vmatprep.subr.mxu0 0.0
  %1195 = vmatpush1.msra.mxu0 %v765
  %1196 = vmatprep.subr.mxu0 0.0
  %1197 = vmatpush1.msra.mxu0 %v766
  %1198 = vmatprep.subr.mxu0 0.0
  %1199 = vmatpush1.msra.mxu0 %v767
  %1200 = vmatprep.subr.mxu0 0.0
  %1201 = vmatpush1.msra.mxu0 %v768
  %1202 = vmatprep.subr.mxu0 0.0
  %1203 = vmatpush1.msra.mxu0 %v878
  %1204 = vmatprep.subr.mxu0 0.0
  %1205 = vmatpush1.msra.mxu0 0.0
  %1206 = vmatprep.subr.mxu0 0.0
  %1207 = vmatpush1.msra.mxu0 0.0
  %1208 = vmatprep.subr.mxu0 0.0
  %1209 = vmatpush1.msra.mxu0 0.0
  %1210 = vmatprep.subr.mxu0 0.0
  %1211 = vmatpush1.msra.mxu0 0.0
  %1212 = vmatprep.subr.mxu0 0.0
  %1213 = vmatpush1.msra.mxu0 0.0
  %1214 = vmatprep.subr.mxu0 0.0
  %1215 = vmatpush1.msra.mxu0 0.0
  %1216 = vmatprep.subr.mxu0 0.0
  %1217 = vmatpush1.msra.mxu0 0.0
  %1218 = vmatprep.subr.mxu0 0.0
  %1219 = vmatpush1.msra.mxu0 0.0
  %1220 = vmatprep.mubr.f32.mxu0 %v1094
  %1221 = vmatmul.mubr.f32.gmra.mrb[0].mxu0 %v1051
  %v1222 = vpop.f32.mrb[0].mxu0
  %v1223 = vadd.f32 0.0, %v1222
  %v1224 = vpop.f32.mrb[0].mxu0
  %1225 = vmatprep.mubr.f32.mxu0 %v1097
  %1226 = vmatmul.mubr.f32.gmra.mrb[0].mxu0 %v1053
  %v1227 = vpop.f32.mrb[0].mxu0
  %v1228 = vadd.f32 0.0, %v1227
  %v1229 = vpop.f32.mrb[0].mxu0
  %1230 = vmatprep.mubr.f32.mxu0 %v1100
  %1231 = vmatmul.mubr.f32.gmra.mrb[0].mxu0 %v1055
  %v1232 = vpop.f32.mrb[0].mxu0
  %v1233 = vadd.f32 0.0, %v1232
  %v1234 = vpop.f32.mrb[0].mxu0
  %1235 = vmatprep.mubr.f32.mxu0 %v1103
  %1236 = vmatmul.mubr.f32.gmra.mrb[0].mxu0 %v1057
  %v1237 = vpop.f32.mrb[0].mxu0
  %v1238 = vadd.f32 0.0, %v1237
  %v1239 = vpop.f32.mrb[0].mxu0
  %1240 = vmatprep.mubr.f32.mxu0 %v1106
  %1241 = vmatmul.mubr.f32.gmra.mrb[0].mxu0 %v1059
  %v1242 = vpop.f32.mrb[0].mxu0
  %v1243 = vadd.f32 0.0, %v1242
  %v1244 = vpop.f32.mrb[0].mxu0
  %1245 = vmatprep.mubr.f32.mxu0 %v1109
  %1246 = vmatmul.mubr.f32.gmra.mrb[0].mxu0 %v1061
  %v1247 = vpop.f32.mrb[0].mxu0
  %v1248 = vadd.f32 0.0, %v1247
  %v1249 = vpop.f32.mrb[0].mxu0
  %1250 = vmatprep.mubr.f32.mxu0 %v1112
  %1251 = vmatmul.mubr.f32.gmra.mrb[0].mxu0 %v1063
  %v1252 = vpop.f32.mrb[0].mxu0
  %v1253 = vadd.f32 0.0, %v1252
  %v1254 = vpop.f32.mrb[0].mxu0
  %1255 = vmatprep.mubr.f32.mxu0 %v1115
  %1256 = vmatmul.mubr.f32.gmra.mrb[0].mxu0 %v1065
  %v1257 = vpop.f32.mrb[0].mxu0
  %v1258 = vadd.f32 0.0, %v1257
  %v1259 = vpop.f32.mrb[0].mxu0
  %1260 = vmatprep.mubr.f32.mxu0 %v1118
  %1261 = vmatmul.mubr.f32.gmra.mrb[0].mxu0 %v1067
  %v1262 = vpop.f32.mrb[0].mxu0
  %v1263 = vadd.f32 0.0, %v1262
  %v1264 = vpop.f32.mrb[0].mxu0
  %1265 = vmatprep.mubr.f32.mxu0 %v1121
  %1266 = vmatmul.mubr.f32.gmra.mrb[0].mxu0 %v1069
  %v1267 = vpop.f32.mrb[0].mxu0
  %v1268 = vadd.f32 0.0, %v1267
  %v1269 = vpop.f32.mrb[0].mxu0
  %1270 = vmatprep.mubr.f32.mxu0 %v1124
  %1271 = vmatmul.mubr.f32.gmra.mrb[0].mxu0 %v1071
  %v1272 = vpop.f32.mrb[0].mxu0
  %v1273 = vadd.f32 0.0, %v1272
  %v1274 = vpop.f32.mrb[0].mxu0
  %1275 = vmatprep.mubr.f32.mxu0 %v1127
  %1276 = vmatmul.mubr.f32.gmra.mrb[0].mxu0 %v1073
  %v1277 = vpop.f32.mrb[0].mxu0
  %v1278 = vadd.f32 0.0, %v1277
  %v1279 = vpop.f32.mrb[0].mxu0
  %1280 = vmatprep.mubr.f32.mxu0 %v1130
  %1281 = vmatmul.mubr.f32.gmra.mrb[0].mxu0 %v1075
  %v1282 = vpop.f32.mrb[0].mxu0
  %v1283 = vadd.f32 0.0, %v1282
  %v1284 = vpop.f32.mrb[0].mxu0
  %1285 = vmatprep.mubr.f32.mxu0 %v1133
  %1286 = vmatmul.mubr.f32.gmra.mrb[0].mxu0 %v1077
  %v1287 = vpop.f32.mrb[0].mxu0
  %v1288 = vadd.f32 0.0, %v1287
  %v1289 = vpop.f32.mrb[0].mxu0
  %1290 = vmatprep.mubr.f32.mxu0 %v1136
  %1291 = vmatmul.mubr.f32.gmra.mrb[0].mxu0 %v1079
  %v1292 = vpop.f32.mrb[0].mxu0
  %v1293 = vadd.f32 0.0, %v1292
  %v1294 = vpop.f32.mrb[0].mxu0
  %1295 = vmatprep.mubr.f32.mxu0 %v1139
  %1296 = vmatmul.mubr.f32.gmra.mrb[0].mxu0 %v1081
  %v1297 = vpop.f32.mrb[0].mxu0
  %v1298 = vadd.f32 0.0, %v1297
  %v1299 = vpop.f32.mrb[0].mxu0
  %1300 = vmatprep.mubr.f32.mxu0 %v1142
  %1301 = vmatmul.mubr.f32.gmra.mrb[0].mxu0 %v1083
  %v1302 = vpop.f32.mrb[0].mxu0
  %v1303 = vadd.f32 0.0, %v1302
  %v1304 = vpop.f32.mrb[0].mxu0
  %1305 = vmatprep.mubr.f32.mxu0 %v1145
  %1306 = vmatmul.mubr.f32.gmra.mrb[0].mxu0 %v1085
  %v1307 = vpop.f32.mrb[0].mxu0
  %v1308 = vadd.f32 0.0, %v1307
  %v1309 = vpop.f32.mrb[0].mxu0
  %1310 = vmatprep.mubr.f32.mxu0 %v1148
  %1311 = vmatmul.mubr.f32.gmra.mrb[0].mxu0 %v1087
  %v1312 = vpop.f32.mrb[0].mxu0
  %v1313 = vadd.f32 0.0, %v1312
  %v1314 = vpop.f32.mrb[0].mxu0
  %1315 = vmatprep.mubr.f32.mxu0 %v1151
  %1316 = vmatmul.mubr.f32.gmra.mrb[0].mxu0 %v1089
  %v1317 = vpop.f32.mrb[0].mxu0
  %v1318 = vadd.f32 0.0, %v1317
  %v1319 = vpop.f32.mrb[0].mxu0
  %1320 = vmatprep.mubr.f32.mxu0 %v1154
  %1321 = vmatmul.mubr.f32.gmra.mrb[0].mxu0 %v1091
  %v1322 = vpop.f32.mrb[0].mxu0
  %v1323 = vadd.f32 0.0, %v1322
  %v1324 = vpop.f32.mrb[0].mxu0
  %1325 = vdwg.mxu0
  %1347 = vrot.lane.b32.xlu0 %v1223, 127
  %v1348 = vpop.permute.xlu0 %1347
  %1349 = vrot.lane.b32.xlu0 %v1228, 127
  %v1350 = vpop.permute.xlu0 %1349
  %1351 = vrot.lane.b32.xlu0 %v1233, 127
  %v1352 = vpop.permute.xlu0 %1351
  %1353 = vrot.lane.b32.xlu0 %v1238, 127
  %v1354 = vpop.permute.xlu0 %1353
  %1355 = vrot.lane.b32.xlu0 %v1243, 127
  %v1356 = vpop.permute.xlu0 %1355
  %1357 = vrot.lane.b32.xlu0 %v1248, 127
  %v1358 = vpop.permute.xlu0 %1357
  %1359 = vrot.lane.b32.xlu0 %v1253, 127
  %v1360 = vpop.permute.xlu0 %1359
  %1361 = vrot.lane.b32.xlu0 %v1258, 127
  %v1362 = vpop.permute.xlu0 %1361
  %1363 = vrot.lane.b32.xlu0 %v1263, 127
  %v1364 = vpop.permute.xlu0 %1363
  %1365 = vrot.lane.b32.xlu0 %v1268, 127
  %v1366 = vpop.permute.xlu0 %1365
  %1367 = vrot.lane.b32.xlu0 %v1273, 127
  %v1368 = vpop.permute.xlu0 %1367
  %1369 = vrot.lane.b32.xlu0 %v1278, 127
  %v1370 = vpop.permute.xlu0 %1369
  %1371 = vrot.lane.b32.xlu0 %v1283, 127
  %v1372 = vpop.permute.xlu0 %1371
  %1373 = vrot.lane.b32.xlu0 %v1288, 127
  %v1374 = vpop.permute.xlu0 %1373
  %1375 = vrot.lane.b32.xlu0 %v1293, 127
  %v1376 = vpop.permute.xlu0 %1375
  %1377 = vrot.lane.b32.xlu0 %v1298, 127
  %v1378 = vpop.permute.xlu0 %1377
  %1379 = vrot.lane.b32.xlu0 %v1303, 127
  %v1380 = vpop.permute.xlu0 %1379
  %1381 = vrot.lane.b32.xlu0 %v1308, 127
  %v1382 = vpop.permute.xlu0 %1381
  %1383 = vrot.lane.b32.xlu0 %v1313, 127
  %v1384 = vpop.permute.xlu0 %1383
  %1385 = vrot.lane.b32.xlu0 %v1318, 127
  %v1386 = vpop.permute.xlu0 %1385
  %1387 = vrot.lane.b32.xlu0 %v1323, 127
  %v1388 = vpop.permute.xlu0 %1387
  %v1410 = vadd.f32 %v947, %v1348
  %v1411 = vadd.f32 %v952, %v1350
  %v1412 = vadd.f32 %v957, %v1352
  %v1413 = vadd.f32 %v962, %v1354
  %v1414 = vadd.f32 %v967, %v1356
  %v1415 = vadd.f32 %v972, %v1358
  %v1416 = vadd.f32 %v977, %v1360
  %v1417 = vadd.f32 %v982, %v1362
  %v1418 = vadd.f32 %v987, %v1364
  %v1419 = vadd.f32 %v992, %v1366
  %v1420 = vadd.f32 %v997, %v1368
  %v1421 = vadd.f32 %v1002, %v1370
  %v1422 = vadd.f32 %v1007, %v1372
  %v1423 = vadd.f32 %v1012, %v1374
  %v1424 = vadd.f32 %v1017, %v1376
  %v1425 = vadd.f32 %v1022, %v1378
  %v1426 = vadd.f32 %v1027, %v1380
  %v1427 = vadd.f32 %v1032, %v1382
  %v1428 = vadd.f32 %v1037, %v1384
  %v1429 = vadd.f32 %v1042, %v1386
  %v1430 = vadd.f32 %v1047, %v1388
  %s1431 = scalar_lea.vmem %s3, 672
  %v1432 = vld [vmem:[%s1431] sm:$0xff]
  %v1433 = vld [vmem:[%s1431 + $0x8] sm:$0xff]
  %v1434 = vld [vmem:[%s1431 + $0x10] sm:$0xff]
  %v1435 = vld [vmem:[%s1431 + $0x18] sm:$0xff]
  %v1436 = vld [vmem:[%s1431 + $0x20] sm:$0xff]
  %v1437 = vld [vmem:[%s1431 + $0x28] sm:$0xff]
  %v1438 = vld [vmem:[%s1431 + $0x30] sm:$0xff]
  %v1439 = vld [vmem:[%s1431 + $0x38] sm:$0xff]
  %v1440 = vld [vmem:[%s1431 + $0x40] sm:$0xff]
  %v1441 = vld [vmem:[%s1431 + $0x48] sm:$0xff]
  %v1442 = vld [vmem:[%s1431 + $0x50] sm:$0xff]
  %v1443 = vld [vmem:[%s1431 + $0x58] sm:$0xff]
  %v1444 = vld [vmem:[%s1431 + $0x60] sm:$0xff]
  %v1445 = vld [vmem:[%s1431 + $0x68] sm:$0xff]
  %v1446 = vld [vmem:[%s1431 + $0x70] sm:$0xff]
  %v1447 = vld [vmem:[%s1431 + $0x78] sm:$0xff]
  %v1448 = vld [vmem:[%s1431 + $0x80] sm:$0xff]
  %v1449 = vld [vmem:[%s1431 + $0x88] sm:$0xff]
  %v1450 = vld [vmem:[%s1431 + $0x90] sm:$0xff]
  %v1451 = vld [vmem:[%s1431 + $0x98] sm:$0xff]
  %v1452 = vld [vmem:[%s1431 + $0xa0] sm:$0xff]
  %v1453 = vld [vmem:[%s1431 + $0xa8] sm:$0xff]
  %v1454 = vld [vmem:[%s1431 + $0xb0] sm:$0xff]
  %v1455 = vld [vmem:[%s1431 + $0xb8] sm:$0xff]
  %v1456 = vld [vmem:[%s1431 + $0xc0] sm:$0xff]
  %v1457 = vld [vmem:[%s1431 + $0xc8] sm:$0xff]
  %v1458 = vld [vmem:[%s1431 + $0xd0] sm:$0xff]
  %v1459 = vld [vmem:[%s1431 + $0xd8] sm:$0xff]
  %v1460 = vld [vmem:[%s1431 + $0xe0] sm:$0xff]
  %v1461 = vld [vmem:[%s1431 + $0xe8] sm:$0xff]
  %v1462 = vld [vmem:[%s1431 + $0xf0] sm:$0xff]
  %v1463 = vld [vmem:[%s1431 + $0xf8] sm:$0xff]
  %v1464 = vld [vmem:[%s1431 + $0x100] sm:$0xff]
  %v1465 = vld [vmem:[%s1431 + $0x108] sm:$0xff]
  %v1466 = vld [vmem:[%s1431 + $0x110] sm:$0xff]
  %v1467 = vld [vmem:[%s1431 + $0x118] sm:$0xff]
  %v1468 = vld [vmem:[%s1431 + $0x120] sm:$0xff]
  %v1469 = vld [vmem:[%s1431 + $0x128] sm:$0xff]
  %v1470 = vld [vmem:[%s1431 + $0x130] sm:$0xff]
  %v1471 = vld [vmem:[%s1431 + $0x138] sm:$0xff]
  %v1472 = vld [vmem:[%s1431 + $0x140] sm:$0xff]
  %v1473 = vld [vmem:[%s1431 + $0x148] sm:$0xff]
  %v1475 = vsel %vm812, %v1433, 0
  %v1478 = vsel %vm812, %v1435, 0
  %v1481 = vsel %vm812, %v1437, 0
  %v1484 = vsel %vm812, %v1439, 0
  %v1487 = vsel %vm812, %v1441, 0
  %v1490 = vsel %vm812, %v1443, 0
  %v1493 = vsel %vm812, %v1445, 0
  %v1496 = vsel %vm812, %v1447, 0
  %v1499 = vsel %vm812, %v1449, 0
  %v1502 = vsel %vm812, %v1451, 0
  %v1505 = vsel %vm812, %v1453, 0
  %v1508 = vsel %vm812, %v1455, 0
  %v1511 = vsel %vm812, %v1457, 0
  %v1514 = vsel %vm812, %v1459, 0
  %v1517 = vsel %vm812, %v1461, 0
  %v1520 = vsel %vm812, %v1463, 0
  %v1523 = vsel %vm812, %v1465, 0
  %v1526 = vsel %vm812, %v1467, 0
  %v1529 = vsel %vm812, %v1469, 0
  %v1532 = vsel %vm812, %v1471, 0
  %v1535 = vsel %vm812, %v1473, 0
  %1537 = vmatprep.subr.mxu0 0.0
  %1538 = vmatpush1.msra.mxu0 %v746
  %1539 = vmatprep.subr.mxu0 0.0
  %1540 = vmatpush1.msra.mxu0 %v747
  %1541 = vmatprep.subr.mxu0 0.0
  %1542 = vmatpush1.msra.mxu0 %v748
  %1543 = vmatprep.subr.mxu0 0.0
  %1544 = vmatpush1.msra.mxu0 %v749
  %1545 = vmatprep.subr.mxu0 0.0
  %1546 = vmatpush1.msra.mxu0 %v750
  %1547 = vmatprep.subr.mxu0 0.0
  %1548 = vmatpush1.msra.mxu0 %v751
  %1549 = vmatprep.subr.mxu0 0.0
  %1550 = vmatpush1.msra.mxu0 %v752
  %1551 = vmatprep.subr.mxu0 0.0
  %1552 = vmatpush1.msra.mxu0 %v753
  %1553 = vmatprep.subr.mxu0 0.0
  %1554 = vmatpush1.msra.mxu0 %v754
  %1555 = vmatprep.subr.mxu0 0.0
  %1556 = vmatpush1.msra.mxu0 %v755
  %1557 = vmatprep.subr.mxu0 0.0
  %1558 = vmatpush1.msra.mxu0 %v756
  %1559 = vmatprep.subr.mxu0 0.0
  %1560 = vmatpush1.msra.mxu0 %v757
  %1561 = vmatprep.subr.mxu0 0.0
  %1562 = vmatpush1.msra.mxu0 %v758
  %1563 = vmatprep.subr.mxu0 0.0
  %1564 = vmatpush1.msra.mxu0 %v759
  %1565 = vmatprep.subr.mxu0 0.0
  %1566 = vmatpush1.msra.mxu0 %v760
  %1567 = vmatprep.subr.mxu0 0.0
  %1568 = vmatpush1.msra.mxu0 %v761
  %1569 = vmatprep.subr.mxu0 0.0
  %1570 = vmatpush1.msra.mxu0 %v762
  %1571 = vmatprep.subr.mxu0 0.0
  %1572 = vmatpush1.msra.mxu0 %v763
  %1573 = vmatprep.subr.mxu0 0.0
  %1574 = vmatpush1.msra.mxu0 %v764
  %1575 = vmatprep.subr.mxu0 0.0
  %1576 = vmatpush1.msra.mxu0 %v765
  %1577 = vmatprep.subr.mxu0 0.0
  %1578 = vmatpush1.msra.mxu0 %v766
  %1579 = vmatprep.subr.mxu0 0.0
  %1580 = vmatpush1.msra.mxu0 %v767
  %1581 = vmatprep.subr.mxu0 0.0
  %1582 = vmatpush1.msra.mxu0 %v768
  %1583 = vmatprep.subr.mxu0 0.0
  %1584 = vmatpush1.msra.mxu0 %v878
  %1585 = vmatprep.subr.mxu0 0.0
  %1586 = vmatpush1.msra.mxu0 0.0
  %1587 = vmatprep.subr.mxu0 0.0
  %1588 = vmatpush1.msra.mxu0 0.0
  %1589 = vmatprep.subr.mxu0 0.0
  %1590 = vmatpush1.msra.mxu0 0.0
  %1591 = vmatprep.subr.mxu0 0.0
  %1592 = vmatpush1.msra.mxu0 0.0
  %1593 = vmatprep.subr.mxu0 0.0
  %1594 = vmatpush1.msra.mxu0 0.0
  %1595 = vmatprep.subr.mxu0 0.0
  %1596 = vmatpush1.msra.mxu0 0.0
  %1597 = vmatprep.subr.mxu0 0.0
  %1598 = vmatpush1.msra.mxu0 0.0
  %1599 = vmatprep.subr.mxu0 0.0
  %1600 = vmatpush1.msra.mxu0 0.0
  %1601 = vmatprep.mubr.f32.mxu0 %v1475
  %1602 = vmatmul.mubr.f32.gmra.mrb[0].mxu0 %v1432
  %v1603 = vpop.f32.mrb[0].mxu0
  %v1604 = vadd.f32 0.0, %v1603
  %v1605 = vpop.f32.mrb[0].mxu0
  %1606 = vmatprep.mubr.f32.mxu0 %v1478
  %1607 = vmatmul.mubr.f32.gmra.mrb[0].mxu0 %v1434
  %v1608 = vpop.f32.mrb[0].mxu0
  %v1609 = vadd.f32 0.0, %v1608
  %v1610 = vpop.f32.mrb[0].mxu0
  %1611 = vmatprep.mubr.f32.mxu0 %v1481
  %1612 = vmatmul.mubr.f32.gmra.mrb[0].mxu0 %v1436
  %v1613 = vpop.f32.mrb[0].mxu0
  %v1614 = vadd.f32 0.0, %v1613
  %v1615 = vpop.f32.mrb[0].mxu0
  %1616 = vmatprep.mubr.f32.mxu0 %v1484
  %1617 = vmatmul.mubr.f32.gmra.mrb[0].mxu0 %v1438
  %v1618 = vpop.f32.mrb[0].mxu0
  %v1619 = vadd.f32 0.0, %v1618
  %v1620 = vpop.f32.mrb[0].mxu0
  %1621 = vmatprep.mubr.f32.mxu0 %v1487
  %1622 = vmatmul.mubr.f32.gmra.mrb[0].mxu0 %v1440
  %v1623 = vpop.f32.mrb[0].mxu0
  %v1624 = vadd.f32 0.0, %v1623
  %v1625 = vpop.f32.mrb[0].mxu0
  %1626 = vmatprep.mubr.f32.mxu0 %v1490
  %1627 = vmatmul.mubr.f32.gmra.mrb[0].mxu0 %v1442
  %v1628 = vpop.f32.mrb[0].mxu0
  %v1629 = vadd.f32 0.0, %v1628
  %v1630 = vpop.f32.mrb[0].mxu0
  %1631 = vmatprep.mubr.f32.mxu0 %v1493
  %1632 = vmatmul.mubr.f32.gmra.mrb[0].mxu0 %v1444
  %v1633 = vpop.f32.mrb[0].mxu0
  %v1634 = vadd.f32 0.0, %v1633
  %v1635 = vpop.f32.mrb[0].mxu0
  %1636 = vmatprep.mubr.f32.mxu0 %v1496
  %1637 = vmatmul.mubr.f32.gmra.mrb[0].mxu0 %v1446
  %v1638 = vpop.f32.mrb[0].mxu0
  %v1639 = vadd.f32 0.0, %v1638
  %v1640 = vpop.f32.mrb[0].mxu0
  %1641 = vmatprep.mubr.f32.mxu0 %v1499
  %1642 = vmatmul.mubr.f32.gmra.mrb[0].mxu0 %v1448
  %v1643 = vpop.f32.mrb[0].mxu0
  %v1644 = vadd.f32 0.0, %v1643
  %v1645 = vpop.f32.mrb[0].mxu0
  %1646 = vmatprep.mubr.f32.mxu0 %v1502
  %1647 = vmatmul.mubr.f32.gmra.mrb[0].mxu0 %v1450
  %v1648 = vpop.f32.mrb[0].mxu0
  %v1649 = vadd.f32 0.0, %v1648
  %v1650 = vpop.f32.mrb[0].mxu0
  %1651 = vmatprep.mubr.f32.mxu0 %v1505
  %1652 = vmatmul.mubr.f32.gmra.mrb[0].mxu0 %v1452
  %v1653 = vpop.f32.mrb[0].mxu0
  %v1654 = vadd.f32 0.0, %v1653
  %v1655 = vpop.f32.mrb[0].mxu0
  %1656 = vmatprep.mubr.f32.mxu0 %v1508
  %1657 = vmatmul.mubr.f32.gmra.mrb[0].mxu0 %v1454
  %v1658 = vpop.f32.mrb[0].mxu0
  %v1659 = vadd.f32 0.0, %v1658
  %v1660 = vpop.f32.mrb[0].mxu0
  %1661 = vmatprep.mubr.f32.mxu0 %v1511
  %1662 = vmatmul.mubr.f32.gmra.mrb[0].mxu0 %v1456
  %v1663 = vpop.f32.mrb[0].mxu0
  %v1664 = vadd.f32 0.0, %v1663
  %v1665 = vpop.f32.mrb[0].mxu0
  %1666 = vmatprep.mubr.f32.mxu0 %v1514
  %1667 = vmatmul.mubr.f32.gmra.mrb[0].mxu0 %v1458
  %v1668 = vpop.f32.mrb[0].mxu0
  %v1669 = vadd.f32 0.0, %v1668
  %v1670 = vpop.f32.mrb[0].mxu0
  %1671 = vmatprep.mubr.f32.mxu0 %v1517
  %1672 = vmatmul.mubr.f32.gmra.mrb[0].mxu0 %v1460
  %v1673 = vpop.f32.mrb[0].mxu0
  %v1674 = vadd.f32 0.0, %v1673
  %v1675 = vpop.f32.mrb[0].mxu0
  %1676 = vmatprep.mubr.f32.mxu0 %v1520
  %1677 = vmatmul.mubr.f32.gmra.mrb[0].mxu0 %v1462
  %v1678 = vpop.f32.mrb[0].mxu0
  %v1679 = vadd.f32 0.0, %v1678
  %v1680 = vpop.f32.mrb[0].mxu0
  %1681 = vmatprep.mubr.f32.mxu0 %v1523
  %1682 = vmatmul.mubr.f32.gmra.mrb[0].mxu0 %v1464
  %v1683 = vpop.f32.mrb[0].mxu0
  %v1684 = vadd.f32 0.0, %v1683
  %v1685 = vpop.f32.mrb[0].mxu0
  %1686 = vmatprep.mubr.f32.mxu0 %v1526
  %1687 = vmatmul.mubr.f32.gmra.mrb[0].mxu0 %v1466
  %v1688 = vpop.f32.mrb[0].mxu0
  %v1689 = vadd.f32 0.0, %v1688
  %v1690 = vpop.f32.mrb[0].mxu0
  %1691 = vmatprep.mubr.f32.mxu0 %v1529
  %1692 = vmatmul.mubr.f32.gmra.mrb[0].mxu0 %v1468
  %v1693 = vpop.f32.mrb[0].mxu0
  %v1694 = vadd.f32 0.0, %v1693
  %v1695 = vpop.f32.mrb[0].mxu0
  %1696 = vmatprep.mubr.f32.mxu0 %v1532
  %1697 = vmatmul.mubr.f32.gmra.mrb[0].mxu0 %v1470
  %v1698 = vpop.f32.mrb[0].mxu0
  %v1699 = vadd.f32 0.0, %v1698
  %v1700 = vpop.f32.mrb[0].mxu0
  %1701 = vmatprep.mubr.f32.mxu0 %v1535
  %1702 = vmatmul.mubr.f32.gmra.mrb[0].mxu0 %v1472
  %v1703 = vpop.f32.mrb[0].mxu0
  %v1704 = vadd.f32 0.0, %v1703
  %v1705 = vpop.f32.mrb[0].mxu0
  %1706 = vdwg.mxu0
  %1728 = vrot.lane.b32.xlu0 %v1604, 126
  %v1729 = vpop.permute.xlu0 %1728
  %1730 = vrot.lane.b32.xlu0 %v1609, 126
  %v1731 = vpop.permute.xlu0 %1730
  %1732 = vrot.lane.b32.xlu0 %v1614, 126
  %v1733 = vpop.permute.xlu0 %1732
  %1734 = vrot.lane.b32.xlu0 %v1619, 126
  %v1735 = vpop.permute.xlu0 %1734
  %1736 = vrot.lane.b32.xlu0 %v1624, 126
  %v1737 = vpop.permute.xlu0 %1736
  %1738 = vrot.lane.b32.xlu0 %v1629, 126
  %v1739 = vpop.permute.xlu0 %1738
  %1740 = vrot.lane.b32.xlu0 %v1634, 126
  %v1741 = vpop.permute.xlu0 %1740
  %1742 = vrot.lane.b32.xlu0 %v1639, 126
  %v1743 = vpop.permute.xlu0 %1742
  %1744 = vrot.lane.b32.xlu0 %v1644, 126
  %v1745 = vpop.permute.xlu0 %1744
  %1746 = vrot.lane.b32.xlu0 %v1649, 126
  %v1747 = vpop.permute.xlu0 %1746
  %1748 = vrot.lane.b32.xlu0 %v1654, 126
  %v1749 = vpop.permute.xlu0 %1748
  %1750 = vrot.lane.b32.xlu0 %v1659, 126
  %v1751 = vpop.permute.xlu0 %1750
  %1752 = vrot.lane.b32.xlu0 %v1664, 126
  %v1753 = vpop.permute.xlu0 %1752
  %1754 = vrot.lane.b32.xlu0 %v1669, 126
  %v1755 = vpop.permute.xlu0 %1754
  %1756 = vrot.lane.b32.xlu0 %v1674, 126
  %v1757 = vpop.permute.xlu0 %1756
  %1758 = vrot.lane.b32.xlu0 %v1679, 126
  %v1759 = vpop.permute.xlu0 %1758
  %1760 = vrot.lane.b32.xlu0 %v1684, 126
  %v1761 = vpop.permute.xlu0 %1760
  %1762 = vrot.lane.b32.xlu0 %v1689, 126
  %v1763 = vpop.permute.xlu0 %1762
  %1764 = vrot.lane.b32.xlu0 %v1694, 126
  %v1765 = vpop.permute.xlu0 %1764
  %1766 = vrot.lane.b32.xlu0 %v1699, 126
  %v1767 = vpop.permute.xlu0 %1766
  %1768 = vrot.lane.b32.xlu0 %v1704, 126
  %v1769 = vpop.permute.xlu0 %1768
  %v1791 = vadd.f32 %v1410, %v1729
  %v1792 = vadd.f32 %v1411, %v1731
  %v1793 = vadd.f32 %v1412, %v1733
  %v1794 = vadd.f32 %v1413, %v1735
  %v1795 = vadd.f32 %v1414, %v1737
  %v1796 = vadd.f32 %v1415, %v1739
  %v1797 = vadd.f32 %v1416, %v1741
  %v1798 = vadd.f32 %v1417, %v1743
  %v1799 = vadd.f32 %v1418, %v1745
  %v1800 = vadd.f32 %v1419, %v1747
  %v1801 = vadd.f32 %v1420, %v1749
  %v1802 = vadd.f32 %v1421, %v1751
  %v1803 = vadd.f32 %v1422, %v1753
  %v1804 = vadd.f32 %v1423, %v1755
  %v1805 = vadd.f32 %v1424, %v1757
  %v1806 = vadd.f32 %v1425, %v1759
  %v1807 = vadd.f32 %v1426, %v1761
  %v1808 = vadd.f32 %v1427, %v1763
  %v1809 = vadd.f32 %v1428, %v1765
  %v1810 = vadd.f32 %v1429, %v1767
  %v1811 = vadd.f32 %v1430, %v1769
  %v1812 = vld [vmem:[%s4] sm:$0xff]
  %v1813 = vld [vmem:[%s4 + $0x8] sm:$0xff]
  %v1814 = vld [vmem:[%s4 + $0x10] sm:$0xff]
  %v1815 = vld [vmem:[%s4 + $0x18] sm:$0xff]
  %v1816 = vld [vmem:[%s4 + $0x20] sm:$0xff]
  %v1817 = vld [vmem:[%s4 + $0x28] sm:$0xff]
  %v1818 = vld [vmem:[%s4 + $0x30] sm:$0xff]
  %v1819 = vld [vmem:[%s4 + $0x38] sm:$0xff]
  %v1820 = vld [vmem:[%s4 + $0x40] sm:$0xff]
  %v1821 = vld [vmem:[%s4 + $0x48] sm:$0xff]
  %v1822 = vld [vmem:[%s4 + $0x50] sm:$0xff]
  %v1823 = vld [vmem:[%s4 + $0x58] sm:$0xff]
  %v1824 = vld [vmem:[%s4 + $0x60] sm:$0xff]
  %v1825 = vld [vmem:[%s4 + $0x68] sm:$0xff]
  %v1826 = vld [vmem:[%s4 + $0x70] sm:$0xff]
  %v1827 = vld [vmem:[%s4 + $0x78] sm:$0xff]
  %v1828 = vld [vmem:[%s4 + $0x80] sm:$0xff]
  %v1829 = vld [vmem:[%s4 + $0x88] sm:$0xff]
  %v1830 = vld [vmem:[%s4 + $0x90] sm:$0xff]
  %v1831 = vld [vmem:[%s4 + $0x98] sm:$0xff]
  %v1832 = vld [vmem:[%s4 + $0xa0] sm:$0xff]
  %1834 = vset.pattern.permute.xlu0 0
  %1835 = vperm.xlu0 %1834, %v1812
  %v1836 = vpop.permute.xlu0 %1835
  %1839 = vset.pattern.permute.xlu0 0
  %1840 = vperm.xlu0 %1839, %v1813
  %v1841 = vpop.permute.xlu0 %1840
  %1844 = vset.pattern.permute.xlu0 0
  %1845 = vperm.xlu0 %1844, %v1814
  %v1846 = vpop.permute.xlu0 %1845
  %1849 = vset.pattern.permute.xlu0 0
  %1850 = vperm.xlu0 %1849, %v1815
  %v1851 = vpop.permute.xlu0 %1850
  %1854 = vset.pattern.permute.xlu0 0
  %1855 = vperm.xlu0 %1854, %v1816
  %v1856 = vpop.permute.xlu0 %1855
  %1859 = vset.pattern.permute.xlu0 0
  %1860 = vperm.xlu0 %1859, %v1817
  %v1861 = vpop.permute.xlu0 %1860
  %1864 = vset.pattern.permute.xlu0 0
  %1865 = vperm.xlu0 %1864, %v1818
  %v1866 = vpop.permute.xlu0 %1865
  %1869 = vset.pattern.permute.xlu0 0
  %1870 = vperm.xlu0 %1869, %v1819
  %v1871 = vpop.permute.xlu0 %1870
  %1874 = vset.pattern.permute.xlu0 0
  %1875 = vperm.xlu0 %1874, %v1820
  %v1876 = vpop.permute.xlu0 %1875
  %1879 = vset.pattern.permute.xlu0 0
  %1880 = vperm.xlu0 %1879, %v1821
  %v1881 = vpop.permute.xlu0 %1880
  %1884 = vset.pattern.permute.xlu0 0
  %1885 = vperm.xlu0 %1884, %v1822
  %v1886 = vpop.permute.xlu0 %1885
  %1889 = vset.pattern.permute.xlu0 0
  %1890 = vperm.xlu0 %1889, %v1823
  %v1891 = vpop.permute.xlu0 %1890
  %1894 = vset.pattern.permute.xlu0 0
  %1895 = vperm.xlu0 %1894, %v1824
  %v1896 = vpop.permute.xlu0 %1895
  %1899 = vset.pattern.permute.xlu0 0
  %1900 = vperm.xlu0 %1899, %v1825
  %v1901 = vpop.permute.xlu0 %1900
  %1904 = vset.pattern.permute.xlu0 0
  %1905 = vperm.xlu0 %1904, %v1826
  %v1906 = vpop.permute.xlu0 %1905
  %1909 = vset.pattern.permute.xlu0 0
  %1910 = vperm.xlu0 %1909, %v1827
  %v1911 = vpop.permute.xlu0 %1910
  %1914 = vset.pattern.permute.xlu0 0
  %1915 = vperm.xlu0 %1914, %v1828
  %v1916 = vpop.permute.xlu0 %1915
  %1919 = vset.pattern.permute.xlu0 0
  %1920 = vperm.xlu0 %1919, %v1829
  %v1921 = vpop.permute.xlu0 %1920
  %1924 = vset.pattern.permute.xlu0 0
  %1925 = vperm.xlu0 %1924, %v1830
  %v1926 = vpop.permute.xlu0 %1925
  %1929 = vset.pattern.permute.xlu0 0
  %1930 = vperm.xlu0 %1929, %v1831
  %v1931 = vpop.permute.xlu0 %1930
  %1934 = vset.pattern.permute.xlu0 0
  %1935 = vperm.xlu0 %1934, %v1832
  %v1936 = vpop.permute.xlu0 %1935
  %v1938 = vadd.f32 %v1791, %v1836
  %v1939 = vadd.f32 %v1792, %v1841
  %v1940 = vadd.f32 %v1793, %v1846
  %v1941 = vadd.f32 %v1794, %v1851
  %v1942 = vadd.f32 %v1795, %v1856
  %v1943 = vadd.f32 %v1796, %v1861
  %v1944 = vadd.f32 %v1797, %v1866
  %v1945 = vadd.f32 %v1798, %v1871
  %v1946 = vadd.f32 %v1799, %v1876
  %v1947 = vadd.f32 %v1800, %v1881
  %v1948 = vadd.f32 %v1801, %v1886
  %v1949 = vadd.f32 %v1802, %v1891
  %v1950 = vadd.f32 %v1803, %v1896
  %v1951 = vadd.f32 %v1804, %v1901
  %v1952 = vadd.f32 %v1805, %v1906
  %v1953 = vadd.f32 %v1806, %v1911
  %v1954 = vadd.f32 %v1807, %v1916
  %v1955 = vadd.f32 %v1808, %v1921
  %v1956 = vadd.f32 %v1809, %v1926
  %v1957 = vadd.f32 %v1810, %v1931
  %v1958 = vadd.f32 %v1811, %v1936
  %v1959 = vmax.f32 %v1938, 0.0
  %v1960 = vmax.f32 %v1939, 0.0
  %v1961 = vmax.f32 %v1940, 0.0
  %v1962 = vmax.f32 %v1941, 0.0
  %v1963 = vmax.f32 %v1942, 0.0
  %v1964 = vmax.f32 %v1943, 0.0
  %v1965 = vmax.f32 %v1944, 0.0
  %v1966 = vmax.f32 %v1945, 0.0
  %v1967 = vmax.f32 %v1946, 0.0
  %v1968 = vmax.f32 %v1947, 0.0
  %v1969 = vmax.f32 %v1948, 0.0
  %v1970 = vmax.f32 %v1949, 0.0
  %v1971 = vmax.f32 %v1950, 0.0
  %v1972 = vmax.f32 %v1951, 0.0
  %v1973 = vmax.f32 %v1952, 0.0
  %v1974 = vmax.f32 %v1953, 0.0
  %v1975 = vmax.f32 %v1954, 0.0
  %v1976 = vmax.f32 %v1955, 0.0
  %v1977 = vmax.f32 %v1956, 0.0
  %v1978 = vmax.f32 %v1957, 0.0
  %v1979 = vmax.f32 %v1958, 0.0
  %v2001 = vrot.slane %v1959, 1
  %v2002 = vrot.slane %v1960, 1
  %v2003 = vsel %vm554, %v2001, %v2002
  %v2004 = vrot.slane %v1961, 1
  %v2005 = vsel %vm554, %v2002, %v2004
  %v2006 = vrot.slane %v1962, 1
  %v2007 = vsel %vm554, %v2004, %v2006
  %v2008 = vrot.slane %v1963, 1
  %v2009 = vsel %vm554, %v2006, %v2008
  %v2010 = vrot.slane %v1964, 1
  %v2011 = vsel %vm554, %v2008, %v2010
  %v2012 = vrot.slane %v1965, 1
  %v2013 = vsel %vm554, %v2010, %v2012
  %v2014 = vrot.slane %v1966, 1
  %v2015 = vsel %vm554, %v2012, %v2014
  %v2016 = vrot.slane %v1967, 1
  %v2017 = vsel %vm554, %v2014, %v2016
  %v2018 = vrot.slane %v1968, 1
  %v2019 = vsel %vm554, %v2016, %v2018
  %v2020 = vrot.slane %v1969, 1
  %v2021 = vsel %vm554, %v2018, %v2020
  %v2022 = vrot.slane %v1970, 1
  %v2023 = vsel %vm554, %v2020, %v2022
  %v2024 = vrot.slane %v1971, 1
  %v2025 = vsel %vm554, %v2022, %v2024
  %v2026 = vrot.slane %v1972, 1
  %v2027 = vsel %vm554, %v2024, %v2026
  %v2028 = vrot.slane %v1973, 1
  %v2029 = vsel %vm554, %v2026, %v2028
  %v2030 = vrot.slane %v1974, 1
  %v2031 = vsel %vm554, %v2028, %v2030
  %v2032 = vrot.slane %v1975, 1
  %v2033 = vsel %vm554, %v2030, %v2032
  %v2034 = vrot.slane %v1976, 1
  %v2035 = vsel %vm554, %v2032, %v2034
  %v2036 = vrot.slane %v1977, 1
  %v2037 = vsel %vm554, %v2034, %v2036
  %v2038 = vrot.slane %v1978, 1
  %v2039 = vsel %vm554, %v2036, %v2038
  %v2040 = vrot.slane %v1979, 1
  %v2041 = vsel %vm554, %v2038, %v2040
  %v2063 = vmax.f32 %v1959, %v2003
  %v2064 = vmax.f32 %v1960, %v2005
  %v2065 = vmax.f32 %v1961, %v2007
  %v2066 = vmax.f32 %v1962, %v2009
  %v2067 = vmax.f32 %v1963, %v2011
  %v2068 = vmax.f32 %v1964, %v2013
  %v2069 = vmax.f32 %v1965, %v2015
  %v2070 = vmax.f32 %v1966, %v2017
  %v2071 = vmax.f32 %v1967, %v2019
  %v2072 = vmax.f32 %v1968, %v2021
  %v2073 = vmax.f32 %v1969, %v2023
  %v2074 = vmax.f32 %v1970, %v2025
  %v2075 = vmax.f32 %v1971, %v2027
  %v2076 = vmax.f32 %v1972, %v2029
  %v2077 = vmax.f32 %v1973, %v2031
  %v2078 = vmax.f32 %v1974, %v2033
  %v2079 = vmax.f32 %v1975, %v2035
  %v2080 = vmax.f32 %v1976, %v2037
  %v2081 = vmax.f32 %v1977, %v2039
  %v2082 = vmax.f32 %v1978, %v2041
  %v2083 = vmax.f32 %v1979, %v2040
  %2105 = vrot.lane.b32.xlu0 %v2063, 127
  %v2106 = vpop.permute.xlu0 %2105
  %2107 = vrot.lane.b32.xlu0 %v2064, 127
  %v2108 = vpop.permute.xlu0 %2107
  %2109 = vrot.lane.b32.xlu0 %v2065, 127
  %v2110 = vpop.permute.xlu0 %2109
  %2111 = vrot.lane.b32.xlu0 %v2066, 127
  %v2112 = vpop.permute.xlu0 %2111
  %2113 = vrot.lane.b32.xlu0 %v2067, 127
  %v2114 = vpop.permute.xlu0 %2113
  %2115 = vrot.lane.b32.xlu0 %v2068, 127
  %v2116 = vpop.permute.xlu0 %2115
  %2117 = vrot.lane.b32.xlu0 %v2069, 127
  %v2118 = vpop.permute.xlu0 %2117
  %2119 = vrot.lane.b32.xlu0 %v2070, 127
  %v2120 = vpop.permute.xlu0 %2119
  %2121 = vrot.lane.b32.xlu0 %v2071, 127
  %v2122 = vpop.permute.xlu0 %2121
  %2123 = vrot.lane.b32.xlu0 %v2072, 127
  %v2124 = vpop.permute.xlu0 %2123
  %2125 = vrot.lane.b32.xlu0 %v2073, 127
  %v2126 = vpop.permute.xlu0 %2125
  %2127 = vrot.lane.b32.xlu0 %v2074, 127
  %v2128 = vpop.permute.xlu0 %2127
  %2129 = vrot.lane.b32.xlu0 %v2075, 127
  %v2130 = vpop.permute.xlu0 %2129
  %2131 = vrot.lane.b32.xlu0 %v2076, 127
  %v2132 = vpop.permute.xlu0 %2131
  %2133 = vrot.lane.b32.xlu0 %v2077, 127
  %v2134 = vpop.permute.xlu0 %2133
  %2135 = vrot.lane.b32.xlu0 %v2078, 127
  %v2136 = vpop.permute.xlu0 %2135
  %2137 = vrot.lane.b32.xlu0 %v2079, 127
  %v2138 = vpop.permute.xlu0 %2137
  %2139 = vrot.lane.b32.xlu0 %v2080, 127
  %v2140 = vpop.permute.xlu0 %2139
  %2141 = vrot.lane.b32.xlu0 %v2081, 127
  %v2142 = vpop.permute.xlu0 %2141
  %2143 = vrot.lane.b32.xlu0 %v2082, 127
  %v2144 = vpop.permute.xlu0 %2143
  %2145 = vrot.lane.b32.xlu0 %v2083, 127
  %v2146 = vpop.permute.xlu0 %2145
  %v2168 = vmax.f32 %v2063, %v2106
  %v2169 = vmax.f32 %v2064, %v2108
  %v2170 = vmax.f32 %v2065, %v2110
  %v2171 = vmax.f32 %v2066, %v2112
  %v2172 = vmax.f32 %v2067, %v2114
  %v2173 = vmax.f32 %v2068, %v2116
  %v2174 = vmax.f32 %v2069, %v2118
  %v2175 = vmax.f32 %v2070, %v2120
  %v2176 = vmax.f32 %v2071, %v2122
  %v2177 = vmax.f32 %v2072, %v2124
  %v2178 = vmax.f32 %v2073, %v2126
  %v2179 = vmax.f32 %v2074, %v2128
  %v2180 = vmax.f32 %v2075, %v2130
  %v2181 = vmax.f32 %v2076, %v2132
  %v2182 = vmax.f32 %v2077, %v2134
  %v2183 = vmax.f32 %v2078, %v2136
  %v2184 = vmax.f32 %v2079, %v2138
  %v2185 = vmax.f32 %v2080, %v2140
  %v2186 = vmax.f32 %v2081, %v2142
  %v2187 = vmax.f32 %v2082, %v2144
  %v2188 = vmax.f32 %v2083, %v2146
  %v2189 = vld [vmem:[%s5] sm:$0xff]
  %v2190 = vld [vmem:[%s5 + $0x8] sm:$0xff]
  %v2191 = vld [vmem:[%s5 + $0x10] sm:$0xff]
  %v2192 = vld [vmem:[%s5 + $0x18] sm:$0xff]
  %v2193 = vld [vmem:[%s5 + $0x20] sm:$0xff]
  %v2194 = vld [vmem:[%s5 + $0x28] sm:$0xff]
  %v2195 = vld [vmem:[%s5 + $0x30] sm:$0xff]
  %v2196 = vld [vmem:[%s5 + $0x38] sm:$0xff]
  %v2197 = vld [vmem:[%s5 + $0x40] sm:$0xff]
  %v2198 = vld [vmem:[%s5 + $0x48] sm:$0xff]
  %v2199 = vld [vmem:[%s5 + $0x50] sm:$0xff]
  %v2200 = vld [vmem:[%s5 + $0x58] sm:$0xff]
  %v2201 = vld [vmem:[%s5 + $0x60] sm:$0xff]
  %v2202 = vld [vmem:[%s5 + $0x68] sm:$0xff]
  %v2203 = vld [vmem:[%s5 + $0x70] sm:$0xff]
  %v2204 = vld [vmem:[%s5 + $0x78] sm:$0xff]
  %v2205 = vld [vmem:[%s5 + $0x80] sm:$0xff]
  %v2206 = vld [vmem:[%s5 + $0x88] sm:$0xff]
  %v2207 = vld [vmem:[%s5 + $0x90] sm:$0xff]
  %v2208 = vld [vmem:[%s5 + $0x98] sm:$0xff]
  %v2209 = vld [vmem:[%s5 + $0xa0] sm:$0xff]
  %v2210 = vld [vmem:[%s5 + $0xa8] sm:$0xff]
  %v2211 = vld [vmem:[%s5 + $0xb0] sm:$0xff]
  %v2212 = vld [vmem:[%s5 + $0xb8] sm:$0xff]
  %v2213 = vld [vmem:[%s5 + $0xc0] sm:$0xff]
  %v2214 = vld [vmem:[%s5 + $0xc8] sm:$0xff]
  %v2215 = vld [vmem:[%s5 + $0xd0] sm:$0xff]
  %v2216 = vld [vmem:[%s5 + $0xd8] sm:$0xff]
  %v2217 = vld [vmem:[%s5 + $0xe0] sm:$0xff]
  %v2218 = vld [vmem:[%s5 + $0xe8] sm:$0xff]
  %v2219 = vld [vmem:[%s5 + $0xf0] sm:$0xff]
  %v2220 = vld [vmem:[%s5 + $0xf8] sm:$0xff]
  %v2221 = vld [vmem:[%s5 + $0x100] sm:$0xff]
  %v2222 = vld [vmem:[%s5 + $0x108] sm:$0xff]
  %v2223 = vld [vmem:[%s5 + $0x110] sm:$0xff]
  %v2224 = vld [vmem:[%s5 + $0x118] sm:$0xff]
  %v2225 = vld [vmem:[%s5 + $0x120] sm:$0xff]
  %v2226 = vld [vmem:[%s5 + $0x128] sm:$0xff]
  %v2227 = vld [vmem:[%s5 + $0x130] sm:$0xff]
  %v2228 = vld [vmem:[%s5 + $0x138] sm:$0xff]
  %v2229 = vld [vmem:[%s5 + $0x140] sm:$0xff]
  %v2230 = vld [vmem:[%s5 + $0x148] sm:$0xff]
  %v2231 = vld [vmem:[%s5 + $0x150] sm:$0xff]
  %v2232 = vld [vmem:[%s5 + $0x158] sm:$0xff]
  %v2233 = vld [vmem:[%s5 + $0x160] sm:$0xff]
  %v2234 = vld [vmem:[%s5 + $0x168] sm:$0xff]
  %v2235 = vld [vmem:[%s5 + $0x170] sm:$0xff]
  %v2236 = vld [vmem:[%s5 + $0x178] sm:$0xff]
  %v2237 = vld [vmem:[%s5 + $0x180] sm:$0xff]
  %v2238 = vld [vmem:[%s5 + $0x188] sm:$0xff]
  %v2239 = vld [vmem:[%s5 + $0x190] sm:$0xff]
  %v2240 = vld [vmem:[%s5 + $0x198] sm:$0xff]
  %v2241 = vld [vmem:[%s5 + $0x1a0] sm:$0xff]
  %v2242 = vld [vmem:[%s5 + $0x1a8] sm:$0xff]
  %v2243 = vld [vmem:[%s5 + $0x1b0] sm:$0xff]
  %v2244 = vld [vmem:[%s5 + $0x1b8] sm:$0xff]
  %v2245 = vld [vmem:[%s5 + $0x1c0] sm:$0xff]
  %v2246 = vld [vmem:[%s5 + $0x1c8] sm:$0xff]
  %v2247 = vld [vmem:[%s5 + $0x1d0] sm:$0xff]
  %v2248 = vld [vmem:[%s5 + $0x1d8] sm:$0xff]
  %v2249 = vld [vmem:[%s5 + $0x1e0] sm:$0xff]
  %v2250 = vld [vmem:[%s5 + $0x1e8] sm:$0xff]
  %v2251 = vld [vmem:[%s5 + $0x1f0] sm:$0xff]
  %v2252 = vld [vmem:[%s5 + $0x1f8] sm:$0xff]
  %v2253 = vld [vmem:[%s5 + $0x200] sm:$0xff]
  %v2254 = vld [vmem:[%s5 + $0x208] sm:$0xff]
  %v2255 = vld [vmem:[%s5 + $0x210] sm:$0x3f]
  %v2256 = vld [vmem:[%s5 + $0x218] sm:$0x3f]
  %vm2257 = vcmask 318464
  %v2259 = vsel %vm2257, %v2190, 0
  %v2262 = vsel %vm2257, %v2192, 0
  %v2265 = vsel %vm2257, %v2194, 0
  %v2268 = vsel %vm2257, %v2196, 0
  %v2271 = vsel %vm2257, %v2198, 0
  %v2274 = vsel %vm2257, %v2200, 0
  %v2277 = vsel %vm2257, %v2202, 0
  %v2280 = vsel %vm2257, %v2204, 0
  %v2283 = vsel %vm2257, %v2206, 0
  %v2286 = vsel %vm2257, %v2208, 0
  %v2289 = vsel %vm2257, %v2210, 0
  %v2292 = vsel %vm2257, %v2212, 0
  %v2295 = vsel %vm2257, %v2214, 0
  %v2298 = vsel %vm2257, %v2216, 0
  %v2301 = vsel %vm2257, %v2218, 0
  %v2304 = vsel %vm2257, %v2220, 0
  %v2307 = vsel %vm2257, %v2222, 0
  %v2310 = vsel %vm2257, %v2224, 0
  %v2313 = vsel %vm2257, %v2226, 0
  %v2316 = vsel %vm2257, %v2228, 0
  %v2319 = vsel %vm2257, %v2230, 0
  %v2322 = vsel %vm2257, %v2232, 0
  %v2325 = vsel %vm2257, %v2234, 0
  %v2328 = vsel %vm2257, %v2236, 0
  %v2331 = vsel %vm2257, %v2238, 0
  %v2334 = vsel %vm2257, %v2240, 0
  %v2337 = vsel %vm2257, %v2242, 0
  %v2340 = vsel %vm2257, %v2244, 0
  %v2343 = vsel %vm2257, %v2246, 0
  %v2346 = vsel %vm2257, %v2248, 0
  %v2349 = vsel %vm2257, %v2250, 0
  %v2352 = vsel %vm2257, %v2252, 0
  %v2355 = vsel %vm2257, %v2254, 0
  %v2358 = vsel %vm2257, %v2256, 0
  %v2361 = vsel %vm554, %v2188, 0
  %2363 = vmatprep.subr.mxu0 0.0
  %2364 = vmatpush1.msra.mxu0 %v2168
  %2365 = vmatprep.subr.mxu0 0.0
  %2366 = vmatpush1.msra.mxu0 %v2169
  %2367 = vmatprep.subr.mxu0 0.0
  %2368 = vmatpush1.msra.mxu0 %v2170
  %2369 = vmatprep.subr.mxu0 0.0
  %2370 = vmatpush1.msra.mxu0 %v2171
  %2371 = vmatprep.subr.mxu0 0.0
  %2372 = vmatpush1.msra.mxu0 %v2172
  %2373 = vmatprep.subr.mxu0 0.0
  %2374 = vmatpush1.msra.mxu0 %v2173
  %2375 = vmatprep.subr.mxu0 0.0
  %2376 = vmatpush1.msra.mxu0 %v2174
  %2377 = vmatprep.subr.mxu0 0.0
  %2378 = vmatpush1.msra.mxu0 %v2175
  %2379 = vmatprep.subr.mxu0 0.0
  %2380 = vmatpush1.msra.mxu0 %v2176
  %2381 = vmatprep.subr.mxu0 0.0
  %2382 = vmatpush1.msra.mxu0 %v2177
  %2383 = vmatprep.subr.mxu0 0.0
  %2384 = vmatpush1.msra.mxu0 %v2178
  %2385 = vmatprep.subr.mxu0 0.0
  %2386 = vmatpush1.msra.mxu0 %v2179
  %2387 = vmatprep.subr.mxu0 0.0
  %2388 = vmatpush1.msra.mxu0 %v2180
  %2389 = vmatprep.subr.mxu0 0.0
  %2390 = vmatpush1.msra.mxu0 %v2181
  %2391 = vmatprep.subr.mxu0 0.0
  %2392 = vmatpush1.msra.mxu0 %v2182
  %2393 = vmatprep.subr.mxu0 0.0
  %2394 = vmatpush1.msra.mxu0 %v2183
  %2395 = vmatprep.subr.mxu0 0.0
  %2396 = vmatpush1.msra.mxu0 %v2184
  %2397 = vmatprep.subr.mxu0 0.0
  %2398 = vmatpush1.msra.mxu0 %v2185
  %2399 = vmatprep.subr.mxu0 0.0
  %2400 = vmatpush1.msra.mxu0 %v2186
  %2401 = vmatprep.subr.mxu0 0.0
  %2402 = vmatpush1.msra.mxu0 %v2187
  %2403 = vmatprep.subr.mxu0 0.0
  %2404 = vmatpush1.msra.mxu0 %v2361
  %2405 = vmatprep.subr.mxu0 0.0
  %2406 = vmatpush1.msra.mxu0 0.0
  %2407 = vmatprep.subr.mxu0 0.0
  %2408 = vmatpush1.msra.mxu0 0.0
  %2409 = vmatprep.subr.mxu0 0.0
  %2410 = vmatpush1.msra.mxu0 0.0
  %2411 = vmatprep.subr.mxu0 0.0
  %2412 = vmatpush1.msra.mxu0 0.0
  %2413 = vmatprep.subr.mxu0 0.0
  %2414 = vmatpush1.msra.mxu0 0.0
  %2415 = vmatprep.subr.mxu0 0.0
  %2416 = vmatpush1.msra.mxu0 0.0
  %2417 = vmatprep.subr.mxu0 0.0
  %2418 = vmatpush1.msra.mxu0 0.0
  %2419 = vmatprep.subr.mxu0 0.0
  %2420 = vmatpush1.msra.mxu0 0.0
  %2421 = vmatprep.subr.mxu0 0.0
  %2422 = vmatpush1.msra.mxu0 0.0
  %2423 = vmatprep.subr.mxu0 0.0
  %2424 = vmatpush1.msra.mxu0 0.0
  %2425 = vmatprep.subr.mxu0 0.0
  %2426 = vmatpush1.msra.mxu0 0.0
  %2427 = vmatprep.mubr.f32.mxu0 %v2259
  %2428 = vmatmul.mubr.f32.gmra.mrb[0].mxu0 %v2189
  %v2429 = vpop.f32.mrb[0].mxu0
  %v2430 = vadd.f32 0.0, %v2429
  %v2431 = vpop.f32.mrb[0].mxu0
  %2432 = vmatprep.mubr.f32.mxu0 %v2262
  %2433 = vmatmul.mubr.f32.gmra.mrb[0].mxu0 %v2191
  %v2434 = vpop.f32.mrb[0].mxu0
  %v2435 = vadd.f32 0.0, %v2434
  %v2436 = vpop.f32.mrb[0].mxu0
  %2437 = vmatprep.mubr.f32.mxu0 %v2265
  %2438 = vmatmul.mubr.f32.gmra.mrb[0].mxu0 %v2193
  %v2439 = vpop.f32.mrb[0].mxu0
  %v2440 = vadd.f32 0.0, %v2439
  %v2441 = vpop.f32.mrb[0].mxu0
  %2442 = vmatprep.mubr.f32.mxu0 %v2268
  %2443 = vmatmul.mubr.f32.gmra.mrb[0].mxu0 %v2195
  %v2444 = vpop.f32.mrb[0].mxu0
  %v2445 = vadd.f32 0.0, %v2444
  %v2446 = vpop.f32.mrb[0].mxu0
  %2447 = vmatprep.mubr.f32.mxu0 %v2271
  %2448 = vmatmul.mubr.f32.gmra.mrb[0].mxu0 %v2197
  %v2449 = vpop.f32.mrb[0].mxu0
  %v2450 = vadd.f32 0.0, %v2449
  %v2451 = vpop.f32.mrb[0].mxu0
  %2452 = vmatprep.mubr.f32.mxu0 %v2274
  %2453 = vmatmul.mubr.f32.gmra.mrb[0].mxu0 %v2199
  %v2454 = vpop.f32.mrb[0].mxu0
  %v2455 = vadd.f32 0.0, %v2454
  %v2456 = vpop.f32.mrb[0].mxu0
  %2457 = vmatprep.mubr.f32.mxu0 %v2277
  %2458 = vmatmul.mubr.f32.gmra.mrb[0].mxu0 %v2201
  %v2459 = vpop.f32.mrb[0].mxu0
  %v2460 = vadd.f32 0.0, %v2459
  %v2461 = vpop.f32.mrb[0].mxu0
  %2462 = vmatprep.mubr.f32.mxu0 %v2280
  %2463 = vmatmul.mubr.f32.gmra.mrb[0].mxu0 %v2203
  %v2464 = vpop.f32.mrb[0].mxu0
  %v2465 = vadd.f32 0.0, %v2464
  %v2466 = vpop.f32.mrb[0].mxu0
  %2467 = vmatprep.mubr.f32.mxu0 %v2283
  %2468 = vmatmul.mubr.f32.gmra.mrb[0].mxu0 %v2205
  %v2469 = vpop.f32.mrb[0].mxu0
  %v2470 = vadd.f32 0.0, %v2469
  %v2471 = vpop.f32.mrb[0].mxu0
  %2472 = vmatprep.mubr.f32.mxu0 %v2286
  %2473 = vmatmul.mubr.f32.gmra.mrb[0].mxu0 %v2207
  %v2474 = vpop.f32.mrb[0].mxu0
  %v2475 = vadd.f32 0.0, %v2474
  %v2476 = vpop.f32.mrb[0].mxu0
  %2477 = vmatprep.mubr.f32.mxu0 %v2289
  %2478 = vmatmul.mubr.f32.gmra.mrb[0].mxu0 %v2209
  %v2479 = vpop.f32.mrb[0].mxu0
  %v2480 = vadd.f32 0.0, %v2479
  %v2481 = vpop.f32.mrb[0].mxu0
  %2482 = vmatprep.mubr.f32.mxu0 %v2292
  %2483 = vmatmul.mubr.f32.gmra.mrb[0].mxu0 %v2211
  %v2484 = vpop.f32.mrb[0].mxu0
  %v2485 = vadd.f32 0.0, %v2484
  %v2486 = vpop.f32.mrb[0].mxu0
  %2487 = vmatprep.mubr.f32.mxu0 %v2295
  %2488 = vmatmul.mubr.f32.gmra.mrb[0].mxu0 %v2213
  %v2489 = vpop.f32.mrb[0].mxu0
  %v2490 = vadd.f32 0.0, %v2489
  %v2491 = vpop.f32.mrb[0].mxu0
  %2492 = vmatprep.mubr.f32.mxu0 %v2298
  %2493 = vmatmul.mubr.f32.gmra.mrb[0].mxu0 %v2215
  %v2494 = vpop.f32.mrb[0].mxu0
  %v2495 = vadd.f32 0.0, %v2494
  %v2496 = vpop.f32.mrb[0].mxu0
  %2497 = vmatprep.mubr.f32.mxu0 %v2301
  %2498 = vmatmul.mubr.f32.gmra.mrb[0].mxu0 %v2217
  %v2499 = vpop.f32.mrb[0].mxu0
  %v2500 = vadd.f32 0.0, %v2499
  %v2501 = vpop.f32.mrb[0].mxu0
  %2502 = vmatprep.mubr.f32.mxu0 %v2304
  %2503 = vmatmul.mubr.f32.gmra.mrb[0].mxu0 %v2219
  %v2504 = vpop.f32.mrb[0].mxu0
  %v2505 = vadd.f32 0.0, %v2504
  %v2506 = vpop.f32.mrb[0].mxu0
  %2507 = vmatprep.mubr.f32.mxu0 %v2307
  %2508 = vmatmul.mubr.f32.gmra.mrb[0].mxu0 %v2221
  %v2509 = vpop.f32.mrb[0].mxu0
  %v2510 = vadd.f32 0.0, %v2509
  %v2511 = vpop.f32.mrb[0].mxu0
  %2512 = vmatprep.mubr.f32.mxu0 %v2310
  %2513 = vmatmul.mubr.f32.gmra.mrb[0].mxu0 %v2223
  %v2514 = vpop.f32.mrb[0].mxu0
  %v2515 = vadd.f32 0.0, %v2514
  %v2516 = vpop.f32.mrb[0].mxu0
  %2517 = vmatprep.mubr.f32.mxu0 %v2313
  %2518 = vmatmul.mubr.f32.gmra.mrb[0].mxu0 %v2225
  %v2519 = vpop.f32.mrb[0].mxu0
  %v2520 = vadd.f32 0.0, %v2519
  %v2521 = vpop.f32.mrb[0].mxu0
  %2522 = vmatprep.mubr.f32.mxu0 %v2316
  %2523 = vmatmul.mubr.f32.gmra.mrb[0].mxu0 %v2227
  %v2524 = vpop.f32.mrb[0].mxu0
  %v2525 = vadd.f32 0.0, %v2524
  %v2526 = vpop.f32.mrb[0].mxu0
  %2527 = vmatprep.mubr.f32.mxu0 %v2319
  %2528 = vmatmul.mubr.f32.gmra.mrb[0].mxu0 %v2229
  %v2529 = vpop.f32.mrb[0].mxu0
  %v2530 = vadd.f32 0.0, %v2529
  %v2531 = vpop.f32.mrb[0].mxu0
  %2532 = vmatprep.mubr.f32.mxu0 %v2322
  %2533 = vmatmul.mubr.f32.gmra.mrb[0].mxu0 %v2231
  %v2534 = vpop.f32.mrb[0].mxu0
  %v2535 = vadd.f32 0.0, %v2534
  %v2536 = vpop.f32.mrb[0].mxu0
  %2537 = vmatprep.mubr.f32.mxu0 %v2325
  %2538 = vmatmul.mubr.f32.gmra.mrb[0].mxu0 %v2233
  %v2539 = vpop.f32.mrb[0].mxu0
  %v2540 = vadd.f32 0.0, %v2539
  %v2541 = vpop.f32.mrb[0].mxu0
  %2542 = vmatprep.mubr.f32.mxu0 %v2328
  %2543 = vmatmul.mubr.f32.gmra.mrb[0].mxu0 %v2235
  %v2544 = vpop.f32.mrb[0].mxu0
  %v2545 = vadd.f32 0.0, %v2544
  %v2546 = vpop.f32.mrb[0].mxu0
  %2547 = vmatprep.mubr.f32.mxu0 %v2331
  %2548 = vmatmul.mubr.f32.gmra.mrb[0].mxu0 %v2237
  %v2549 = vpop.f32.mrb[0].mxu0
  %v2550 = vadd.f32 0.0, %v2549
  %v2551 = vpop.f32.mrb[0].mxu0
  %2552 = vmatprep.mubr.f32.mxu0 %v2334
  %2553 = vmatmul.mubr.f32.gmra.mrb[0].mxu0 %v2239
  %v2554 = vpop.f32.mrb[0].mxu0
  %v2555 = vadd.f32 0.0, %v2554
  %v2556 = vpop.f32.mrb[0].mxu0
  %2557 = vmatprep.mubr.f32.mxu0 %v2337
  %2558 = vmatmul.mubr.f32.gmra.mrb[0].mxu0 %v2241
  %v2559 = vpop.f32.mrb[0].mxu0
  %v2560 = vadd.f32 0.0, %v2559
  %v2561 = vpop.f32.mrb[0].mxu0
  %2562 = vmatprep.mubr.f32.mxu0 %v2340
  %2563 = vmatmul.mubr.f32.gmra.mrb[0].mxu0 %v2243
  %v2564 = vpop.f32.mrb[0].mxu0
  %v2565 = vadd.f32 0.0, %v2564
  %v2566 = vpop.f32.mrb[0].mxu0
  %2567 = vmatprep.mubr.f32.mxu0 %v2343
  %2568 = vmatmul.mubr.f32.gmra.mrb[0].mxu0 %v2245
  %v2569 = vpop.f32.mrb[0].mxu0
  %v2570 = vadd.f32 0.0, %v2569
  %v2571 = vpop.f32.mrb[0].mxu0
  %2572 = vmatprep.mubr.f32.mxu0 %v2346
  %2573 = vmatmul.mubr.f32.gmra.mrb[0].mxu0 %v2247
  %v2574 = vpop.f32.mrb[0].mxu0
  %v2575 = vadd.f32 0.0, %v2574
  %v2576 = vpop.f32.mrb[0].mxu0
  %2577 = vmatprep.mubr.f32.mxu0 %v2349
  %2578 = vmatmul.mubr.f32.gmra.mrb[0].mxu0 %v2249
  %v2579 = vpop.f32.mrb[0].mxu0
  %v2580 = vadd.f32 0.0, %v2579
  %v2581 = vpop.f32.mrb[0].mxu0
  %2582 = vmatprep.mubr.f32.mxu0 %v2352
  %2583 = vmatmul.mubr.f32.gmra.mrb[0].mxu0 %v2251
  %v2584 = vpop.f32.mrb[0].mxu0
  %v2585 = vadd.f32 0.0, %v2584
  %v2586 = vpop.f32.mrb[0].mxu0
  %2587 = vmatprep.mubr.f32.mxu0 %v2355
  %2588 = vmatmul.mubr.f32.gmra.mrb[0].mxu0 %v2253
  %v2589 = vpop.f32.mrb[0].mxu0
  %v2590 = vadd.f32 0.0, %v2589
  %v2591 = vpop.f32.mrb[0].mxu0
  %2592 = vmatprep.mubr.f32.mxu0 %v2358
  %2593 = vmatmul.mubr.f32.gmra.mrb[0].mxu0 %v2255
  %v2594 = vpop.f32.mrb[0].mxu0
  %v2595 = vadd.f32 0.0, %v2594
  %v2596 = vpop.f32.mrb[0].mxu0
  %2597 = vdwg.mxu0
  %v2598 = vld [vmem:[%s6] sm:$0xff]
  %v2599 = vld [vmem:[%s6 + $0x8] sm:$0xff]
  %v2600 = vld [vmem:[%s6 + $0x10] sm:$0xff]
  %v2601 = vld [vmem:[%s6 + $0x18] sm:$0xff]
  %v2602 = vld [vmem:[%s6 + $0x20] sm:$0xff]
  %v2603 = vld [vmem:[%s6 + $0x28] sm:$0xff]
  %v2604 = vld [vmem:[%s6 + $0x30] sm:$0xff]
  %v2605 = vld [vmem:[%s6 + $0x38] sm:$0xff]
  %v2606 = vld [vmem:[%s6 + $0x40] sm:$0xff]
  %v2607 = vld [vmem:[%s6 + $0x48] sm:$0xff]
  %v2608 = vld [vmem:[%s6 + $0x50] sm:$0xff]
  %v2609 = vld [vmem:[%s6 + $0x58] sm:$0xff]
  %v2610 = vld [vmem:[%s6 + $0x60] sm:$0xff]
  %v2611 = vld [vmem:[%s6 + $0x68] sm:$0xff]
  %v2612 = vld [vmem:[%s6 + $0x70] sm:$0xff]
  %v2613 = vld [vmem:[%s6 + $0x78] sm:$0xff]
  %v2614 = vld [vmem:[%s6 + $0x80] sm:$0xff]
  %v2615 = vld [vmem:[%s6 + $0x88] sm:$0xff]
  %v2616 = vld [vmem:[%s6 + $0x90] sm:$0xff]
  %v2617 = vld [vmem:[%s6 + $0x98] sm:$0xff]
  %v2618 = vld [vmem:[%s6 + $0xa0] sm:$0xff]
  %v2619 = vld [vmem:[%s6 + $0xa8] sm:$0xff]
  %v2620 = vld [vmem:[%s6 + $0xb0] sm:$0xff]
  %v2621 = vld [vmem:[%s6 + $0xb8] sm:$0xff]
  %v2622 = vld [vmem:[%s6 + $0xc0] sm:$0xff]
  %v2623 = vld [vmem:[%s6 + $0xc8] sm:$0xff]
  %v2624 = vld [vmem:[%s6 + $0xd0] sm:$0xff]
  %v2625 = vld [vmem:[%s6 + $0xd8] sm:$0xff]
  %v2626 = vld [vmem:[%s6 + $0xe0] sm:$0xff]
  %v2627 = vld [vmem:[%s6 + $0xe8] sm:$0xff]
  %v2628 = vld [vmem:[%s6 + $0xf0] sm:$0xff]
  %v2629 = vld [vmem:[%s6 + $0xf8] sm:$0xff]
  %v2630 = vld [vmem:[%s6 + $0x100] sm:$0xff]
  %v2631 = vld [vmem:[%s6 + $0x108] sm:$0x3f]
  %v2632 = vmul.f32 %v2430, %v2598
  %v2633 = vmul.f32 %v2435, %v2599
  %v2634 = vmul.f32 %v2440, %v2600
  %v2635 = vmul.f32 %v2445, %v2601
  %v2636 = vmul.f32 %v2450, %v2602
  %v2637 = vmul.f32 %v2455, %v2603
  %v2638 = vmul.f32 %v2460, %v2604
  %v2639 = vmul.f32 %v2465, %v2605
  %v2640 = vmul.f32 %v2470, %v2606
  %v2641 = vmul.f32 %v2475, %v2607
  %v2642 = vmul.f32 %v2480, %v2608
  %v2643 = vmul.f32 %v2485, %v2609
  %v2644 = vmul.f32 %v2490, %v2610
  %v2645 = vmul.f32 %v2495, %v2611
  %v2646 = vmul.f32 %v2500, %v2612
  %v2647 = vmul.f32 %v2505, %v2613
  %v2648 = vmul.f32 %v2510, %v2614
  %v2649 = vmul.f32 %v2515, %v2615
  %v2650 = vmul.f32 %v2520, %v2616
  %v2651 = vmul.f32 %v2525, %v2617
  %v2652 = vmul.f32 %v2530, %v2618
  %v2653 = vmul.f32 %v2535, %v2619
  %v2654 = vmul.f32 %v2540, %v2620
  %v2655 = vmul.f32 %v2545, %v2621
  %v2656 = vmul.f32 %v2550, %v2622
  %v2657 = vmul.f32 %v2555, %v2623
  %v2658 = vmul.f32 %v2560, %v2624
  %v2659 = vmul.f32 %v2565, %v2625
  %v2660 = vmul.f32 %v2570, %v2626
  %v2661 = vmul.f32 %v2575, %v2627
  %v2662 = vmul.f32 %v2580, %v2628
  %v2663 = vmul.f32 %v2585, %v2629
  %v2664 = vmul.f32 %v2590, %v2630
  %v2665 = vmul.f32 %v2595, %v2631
  %v2666 = vld [vmem:[%s7] sm:$0xff]
  %v2667 = vld [vmem:[%s7 + $0x8] sm:$0xff]
  %v2668 = vld [vmem:[%s7 + $0x10] sm:$0xff]
  %v2669 = vld [vmem:[%s7 + $0x18] sm:$0x3]
  %v2670 = vld [vmem:[%s7 + $0x20] sm:$0x3]
  %v2671 = vld [vmem:[%s7 + $0x28] sm:$0x3]
  %vm2672 = vcmask 113664
  %v2674 = vsel %vm2672, %v2668, 0
  %v2677 = vsel %vm2672, %v2671, 0
  %vm2679 = vcmask 1045504
  %v2681 = vsel %vm2679, %v2665, 0
  %2683 = vmatprep.subr.mxu0 0.0
  %2684 = vmatpush1.msra.mxu0 %v2632
  %2685 = vmatprep.subr.mxu0 0.0
  %2686 = vmatpush1.msra.mxu0 %v2633
  %2687 = vmatprep.subr.mxu0 0.0
  %2688 = vmatpush1.msra.mxu0 %v2634
  %2689 = vmatprep.subr.mxu0 0.0
  %2690 = vmatpush1.msra.mxu0 %v2635
  %2691 = vmatprep.subr.mxu0 0.0
  %2692 = vmatpush1.msra.mxu0 %v2636
  %2693 = vmatprep.subr.mxu0 0.0
  %2694 = vmatpush1.msra.mxu0 %v2637
  %2695 = vmatprep.subr.mxu0 0.0
  %2696 = vmatpush1.msra.mxu0 %v2638
  %2697 = vmatprep.subr.mxu0 0.0
  %2698 = vmatpush1.msra.mxu0 %v2639
  %2699 = vmatprep.subr.mxu0 0.0
  %2700 = vmatpush1.msra.mxu0 %v2640
  %2701 = vmatprep.subr.mxu0 0.0
  %2702 = vmatpush1.msra.mxu0 %v2641
  %2703 = vmatprep.subr.mxu0 0.0
  %2704 = vmatpush1.msra.mxu0 %v2642
  %2705 = vmatprep.subr.mxu0 0.0
  %2706 = vmatpush1.msra.mxu0 %v2643
  %2707 = vmatprep.subr.mxu0 0.0
  %2708 = vmatpush1.msra.mxu0 %v2644
  %2709 = vmatprep.subr.mxu0 0.0
  %2710 = vmatpush1.msra.mxu0 %v2645
  %2711 = vmatprep.subr.mxu0 0.0
  %2712 = vmatpush1.msra.mxu0 %v2646
  %2713 = vmatprep.subr.mxu0 0.0
  %2714 = vmatpush1.msra.mxu0 %v2647
  %2715 = vmatprep.subr.mxu0 0.0
  %2716 = vmatpush1.msra.mxu0 %v2648
  %2717 = vmatprep.subr.mxu0 0.0
  %2718 = vmatpush1.msra.mxu0 %v2649
  %2719 = vmatprep.subr.mxu0 0.0
  %2720 = vmatpush1.msra.mxu0 %v2650
  %2721 = vmatprep.subr.mxu0 0.0
  %2722 = vmatpush1.msra.mxu0 %v2651
  %2723 = vmatprep.subr.mxu0 0.0
  %2724 = vmatpush1.msra.mxu0 %v2652
  %2725 = vmatprep.subr.mxu0 0.0
  %2726 = vmatpush1.msra.mxu0 %v2653
  %2727 = vmatprep.subr.mxu0 0.0
  %2728 = vmatpush1.msra.mxu0 %v2654
  %2729 = vmatprep.subr.mxu0 0.0
  %2730 = vmatpush1.msra.mxu0 %v2655
  %2731 = vmatprep.subr.mxu0 0.0
  %2732 = vmatpush1.msra.mxu0 %v2656
  %2733 = vmatprep.subr.mxu0 0.0
  %2734 = vmatpush1.msra.mxu0 %v2657
  %2735 = vmatprep.subr.mxu0 0.0
  %2736 = vmatpush1.msra.mxu0 %v2658
  %2737 = vmatprep.subr.mxu0 0.0
  %2738 = vmatpush1.msra.mxu0 %v2659
  %2739 = vmatprep.subr.mxu0 0.0
  %2740 = vmatpush1.msra.mxu0 %v2660
  %2741 = vmatprep.subr.mxu0 0.0
  %2742 = vmatpush1.msra.mxu0 %v2661
  %2743 = vmatprep.subr.mxu0 0.0
  %2744 = vmatpush1.msra.mxu0 %v2662
  %2745 = vmatprep.subr.mxu0 0.0
  %2746 = vmatpush1.msra.mxu0 %v2663
  %2747 = vmatprep.mubr.f32.mxu0 %v2667
  %2748 = vmatmul.mubr.f32.gmra.mrb[0].mxu0 %v2666
  %v2749 = vpop.f32.mrb[0].mxu0
  %v2750 = vadd.f32 0.0, %v2749
  %v2751 = vpop.f32.mrb[0].mxu0
  %2752 = vmatprep.mubr.f32.mxu0 %v2670
  %2753 = vmatmul.mubr.f32.gmra.mrb[0].mxu0 %v2669
  %v2754 = vpop.f32.mrb[0].mxu0
  %v2755 = vadd.f32 0.0, %v2754
  %v2756 = vpop.f32.mrb[0].mxu0
  %2757 = vdwg.mxu0
  %2758 = vmatprep.subr.mxu0 0.0
  %2759 = vmatpush1.msra.mxu0 %v2664
  %2760 = vmatprep.subr.mxu0 0.0
  %2761 = vmatpush1.msra.mxu0 %v2681
  %2762 = vmatprep.subr.mxu0 0.0
  %2763 = vmatpush1.msra.mxu0 0.0
  %2764 = vmatprep.subr.mxu0 0.0
  %2765 = vmatpush1.msra.mxu0 0.0
  %2766 = vmatprep.subr.mxu0 0.0
  %2767 = vmatpush1.msra.mxu0 0.0
  %2768 = vmatprep.subr.mxu0 0.0
  %2769 = vmatpush1.msra.mxu0 0.0
  %2770 = vmatprep.subr.mxu0 0.0
  %2771 = vmatpush1.msra.mxu0 0.0
  %2772 = vmatprep.subr.mxu0 0.0
  %2773 = vmatpush1.msra.mxu0 0.0
  %2774 = vmatprep.subr.mxu0 0.0
  %2775 = vmatpush1.msra.mxu0 0.0
  %2776 = vmatprep.subr.mxu0 0.0
  %2777 = vmatpush1.msra.mxu0 0.0
  %2778 = vmatprep.subr.mxu0 0.0
  %2779 = vmatpush1.msra.mxu0 0.0
  %2780 = vmatprep.subr.mxu0 0.0
  %2781 = vmatpush1.msra.mxu0 0.0
  %2782 = vmatprep.subr.mxu0 0.0
  %2783 = vmatpush1.msra.mxu0 0.0
  %2784 = vmatprep.subr.mxu0 0.0
  %2785 = vmatpush1.msra.mxu0 0.0
  %2786 = vmatprep.subr.mxu0 0.0
  %2787 = vmatpush1.msra.mxu0 0.0
  %2788 = vmatprep.subr.mxu0 0.0
  %2789 = vmatpush1.msra.mxu0 0.0
  %2790 = vmatprep.subr.mxu0 0.0
  %2791 = vmatpush1.msra.mxu0 0.0
  %2792 = vmatprep.subr.mxu0 0.0
  %2793 = vmatpush1.msra.mxu0 0.0
  %2794 = vmatprep.subr.mxu0 0.0
  %2795 = vmatpush1.msra.mxu0 0.0
  %2796 = vmatprep.subr.mxu0 0.0
  %2797 = vmatpush1.msra.mxu0 0.0
  %2798 = vmatprep.subr.mxu0 0.0
  %2799 = vmatpush1.msra.mxu0 0.0
  %2800 = vmatprep.subr.mxu0 0.0
  %2801 = vmatpush1.msra.mxu0 0.0
  %2802 = vmatprep.subr.mxu0 0.0
  %2803 = vmatpush1.msra.mxu0 0.0
  %2804 = vmatprep.subr.mxu0 0.0
  %2805 = vmatpush1.msra.mxu0 0.0
  %2806 = vmatprep.subr.mxu0 0.0
  %2807 = vmatpush1.msra.mxu0 0.0
  %2808 = vmatprep.subr.mxu0 0.0
  %2809 = vmatpush1.msra.mxu0 0.0
  %2810 = vmatprep.subr.mxu0 0.0
  %2811 = vmatpush1.msra.mxu0 0.0
  %2812 = vmatprep.subr.mxu0 0.0
  %2813 = vmatpush1.msra.mxu0 0.0
  %2814 = vmatprep.subr.mxu0 0.0
  %2815 = vmatpush1.msra.mxu0 0.0
  %2816 = vmatprep.subr.mxu0 0.0
  %2817 = vmatpush1.msra.mxu0 0.0
  %2818 = vmatprep.subr.mxu0 0.0
  %2819 = vmatpush1.msra.mxu0 0.0
  %2820 = vmatprep.subr.mxu0 0.0
  %2821 = vmatpush1.msra.mxu0 0.0
  %2822 = vmatprep.mubr.f32.mxu0 0.0
  %2823 = vmatmul.mubr.f32.gmra.mrb[0].mxu0 %v2674
  %v2824 = vpop.f32.mrb[0].mxu0
  %v2825 = vadd.f32 %v2750, %v2824
  %v2826 = vpop.f32.mrb[0].mxu0
  %2827 = vmatprep.mubr.f32.mxu0 0.0
  %2828 = vmatmul.mubr.f32.gmra.mrb[0].mxu0 %v2677
  %v2829 = vpop.f32.mrb[0].mxu0
  %v2830 = vadd.f32 %v2755, %v2829
  %v2831 = vpop.f32.mrb[0].mxu0
  %2832 = vdwg.mxu0
  %vm2833 = vcmask 220160
  %v2834 = vsel %vm2833, %v2825, 0.0
  %2835 = vadd.xlane.f32.xlu0 %v2834
  %v2836 = vpop.xlane.xlu0 %2835
  %vm2837 = vcmask 214016
  %v2838 = vsel %vm2837, %v2830, 0.0
  %2839 = vadd.xlane.f32.xlu0 %v2838
  %v2840 = vpop.xlane.xlu0 %2839
  %v2841 = vld [vmem:[%s8] sm:$0xff]
  %v2842 = vld [vmem:[%s8 + $0x8] sm:$0x3]
  %v2843 = vadd.f32 %v2836, %v2841
  %v2844 = vadd.f32 %v2840, %v2842
  %vm2845 = vcmask 7168
  %2846 = vst.msk [vmem:[%s9] sm:$0xff] %vm2845, %v2843
  %vm2847 = vcmask 1024
  %2848 = vst.msk [vmem:[%s9 + $0x8] sm:$0x3] %vm2847, %v2844
  // Predicated region
  $region38: #{net_forward.1} parent=0 // pred_check
    _
  $region39: #{net_forward.1} parent=0 // pred_check_branch
    %2850 = sbr.rel (0) target = $region41
  $region40: #{net_forward.1} parent=0 // pred_region
    _
  $region41: #{net_forward.1} parent=0 // pred_fallthru
    _
  // Predicated region
  $region42: #{net_forward.1} parent=0 // pred_check
    _
  $region43: #{net_forward.1} parent=0 // pred_check_branch
    %2852 = sbr.rel (0) target = $region45
  $region44: #{net_forward.1} parent=0 // pred_region
    _
  $region45: #{net_forward.1} parent=0 // pred_fallthru
    _

</llo_original>
